<compile_context>
chip_gen: v7x
topology: tpu7x:2x2x1
jax: 0.10.0
libtpu: 0.0.40
codegen_flags: <defaults>
</compile_context>

<pallas_src>
import functools

import jax
import jax.numpy as jnp
from jax.experimental import pallas as pl
from jax.experimental.pallas import tpu as pltpu

VOCAB = 39859
EMBED = 128
HIDDEN = 2048
OUT = 512
GATES = 4 * HIDDEN          # 8192


def _pick_tile(m, candidates=(512, 256, 128, 64, 32, 16, 8)):
    for c in candidates:
        if m % c == 0:
            return c
    return m


# ---------------------------------------------------------------------------
# Batched projection kernel: Y = X(bf16) @ W(bf16) + b, f32 accumulation/output.
# Grid tiles the row (M = T*B) axis and the output-column (N) axis.
# ---------------------------------------------------------------------------
def proj_kernel(x_ref, w_ref, b_ref, o_ref):
    o_ref[...] = (jnp.dot(x_ref[...], w_ref[...],
                          preferred_element_type=jnp.float32)
                  + b_ref[...])


def batched_projection(x_bf16, w_bf16, bias_f32, *, tn, tm=None):
    assert x_bf16.dtype == jnp.bfloat16 and w_bf16.dtype == jnp.bfloat16
    M, K = x_bf16.shape
    Kw, N = w_bf16.shape
    assert K == Kw and N % tn == 0
    if tm is None:
        tm = _pick_tile(M)
    assert M % tm == 0
    grid_spec = pltpu.PrefetchScalarGridSpec(
        num_scalar_prefetch=0,
        grid=(M // tm, N // tn),
        in_specs=[
            pl.BlockSpec((tm, K), lambda m, n: (m, 0)),     # row tile of X (bf16)
            pl.BlockSpec((K, tn), lambda m, n: (0, n)),     # weight column tile
            pl.BlockSpec((1, tn), lambda m, n: (0, n)),     # bias tile
        ],
        out_specs=pl.BlockSpec((tm, tn), lambda m, n: (m, n)),
    )
    return pl.pallas_call(
        proj_kernel,
        out_shape=jax.ShapeDtypeStruct((M, N), jnp.float32),
        grid_spec=grid_spec,
        compiler_params=pltpu.CompilerParams(
            dimension_semantics=("parallel", "parallel"),
            vmem_limit_bytes=48 * 1024 * 1024),
    )(x_bf16, w_bf16, bias_f32)


# ---------------------------------------------------------------------------
# LSTM recurrence kernel: one grid step per timestep, W_hh^T VMEM-resident.
# ---------------------------------------------------------------------------
def lstm_recurrence_kernel(gx_ref, whh_hbm, h_out_ref,
                           whh_vmem, h_sc, c_sc, dma_sem, *, wait_step):
    t = pl.program_id(0)

    def gx(g):
        # (B, HIDDEN) f32 slice of the hoisted x-projection for gate g.
        return gx_ref[0, :, g * HIDDEN:(g + 1) * HIDDEN]

    def write_state(c_new, h_new):
        c_sc[...] = c_new
        h_bf = h_new.astype(jnp.bfloat16)
        h_sc[...] = h_bf
        h_out_ref[0] = h_bf

    @pl.when(t == 0)
    def _():
        # Start the one-time 32 MiB W_hh^T HBM->VMEM copy; do NOT wait here.
        # h0 == 0, so step 0 needs no recurrent matmul and the DMA latency is
        # hidden behind the step-0 gate activations.
        pltpu.make_async_copy(whh_hbm, whh_vmem, dma_sem).start()
        i_g = jax.nn.sigmoid(gx(0))
        g_g = jnp.tanh(gx(2))
        o_g = jax.nn.sigmoid(gx(3))
        c_new = i_g * g_g                              # f_g * c0 == 0
        write_state(c_new, o_g * jnp.tanh(c_new))

    # Block on the resident weights right before their first use (t == 1);
    # if the sequence has a single step, drain the semaphore at t == 0 instead.
    @pl.when(t == wait_step)
    def _():
        pltpu.make_async_copy(whh_hbm, whh_vmem, dma_sem).wait()

    @pl.when(t > 0)
    def _():
        h_bf = h_sc[...]                               # (B, H) bf16

        # Gate-by-gate over the 4H axis: one (B,H)x(H,H) bf16 matmul (f32 acc) +
        # activation per gate; only (B, H) f32 intermediates are live at a time.
        def gate_pre(g):
            return gx(g) + jnp.dot(
                h_bf, whh_vmem[:, g * HIDDEN:(g + 1) * HIDDEN],
                preferred_element_type=jnp.float32)

        i_g = jax.nn.sigmoid(gate_pre(0))
        f_g = jax.nn.sigmoid(gate_pre(1))
        g_g = jnp.tanh(gate_pre(2))
        o_g = jax.nn.sigmoid(gate_pre(3))
        c_new = f_g * c_sc[...] + i_g * g_g            # f32 cell update
        write_state(c_new, o_g * jnp.tanh(c_new))


def lstm_model_forward(ids, params):
    emb, wih_T, whh_T, b, wfc_T, bfc = params
    T, B = ids.shape

    # Pad batch to a multiple of 16 so bf16 MXU/VPU sublanes are filled.  Padding
    # rows use token id 0 (padding_idx -> zero embedding), are computed
    # independently, and are sliced off at the end.
    B_pad = max(16, ((B + 15) // 16) * 16)
    if B_pad != B:
        ids = jnp.pad(ids, ((0, 0), (0, B_pad - B)))

    # One-time bf16 weight casts (matmul operands bf16, accumulation f32).
    wih_bf = wih_T.astype(jnp.bfloat16)    # (EMBED, 4H)
    whh_bf = whh_T.astype(jnp.bfloat16)    # (HIDDEN, 4H) -> VMEM-resident 32 MiB
    wfc_bf = wfc_T.astype(jnp.bfloat16)    # (HIDDEN, OUT)

    # Embedding gather (data-dependent row gather; plain JAX glue).
    embedded = jnp.take(emb, ids, axis=0)                        # (T, Bp, EMBED) f32
    x_bf = embedded.astype(jnp.bfloat16).reshape(T * B_pad, EMBED)

    # Hoisted input projection over all T*Bp rows at once.
    gates_x = batched_projection(x_bf, wih_bf, b, tn=2048)       # (T*Bp, 4H) f32
    gates_x = gates_x.reshape(T, B_pad, GATES)

    # Sequential LSTM recurrence.
    rec_vmem = (HIDDEN * GATES * 2          # resident W_hh^T (bf16)
                + 2 * B_pad * GATES * 4     # double-buffered gates_x blocks (f32)
                + 2 * B_pad * HIDDEN * 2    # double-buffered h output blocks (bf16)
                + B_pad * HIDDEN * 2        # h scratch (bf16)
                + B_pad * HIDDEN * 4        # c scratch (f32)
                + (4 << 20))                # headroom
    grid_spec = pltpu.PrefetchScalarGridSpec(
        num_scalar_prefetch=0,
        grid=(T,),
        in_specs=[
            pl.BlockSpec((1, B_pad, GATES), lambda t: (t, 0, 0)),   # gates_x[t]
            pl.BlockSpec(memory_space=pl.ANY),                      # W_hh^T stays in HBM
        ],
        out_specs=pl.BlockSpec((1, B_pad, HIDDEN), lambda t: (t, 0, 0)),
        scratch_shapes=[
            pltpu.VMEM((HIDDEN, GATES), jnp.bfloat16),   # resident W_hh^T (32 MiB)
            pltpu.VMEM((B_pad, HIDDEN), jnp.bfloat16),   # h (bf16)
            pltpu.VMEM((B_pad, HIDDEN), jnp.float32),    # c (f32)
            pltpu.SemaphoreType.DMA(()),
        ],
    )
    hs = pl.pallas_call(
        functools.partial(lstm_recurrence_kernel, wait_step=1 if T > 1 else 0),
        out_shape=jax.ShapeDtypeStruct((T, B_pad, HIDDEN), jnp.bfloat16),
        grid_spec=grid_spec,
        compiler_params=pltpu.CompilerParams(
            dimension_semantics=("arbitrary",),
            vmem_limit_bytes=min(rec_vmem, 60 * 1024 * 1024)),
    )(gates_x, whh_bf)                                           # (T, Bp, H) bf16

    # Hoisted FC projection over all T*Bp rows (hs already bf16); tn=256 keeps the
    # N grid >= 2 programs for pipelining / core sharding.
    out = batched_projection(hs.reshape(T * B_pad, HIDDEN), wfc_bf, bfc, tn=256)
    out = out.reshape(T, B_pad, OUT)
    return out[:, :B, :]


def init_params(key):
    k_emb, k_wih, k_whh, k_bih, k_bhh, k_wfc, k_bfc = jax.random.split(key, 7)
    k = 1.0 / jnp.sqrt(HIDDEN)

    emb = jax.random.normal(k_emb, (VOCAB, EMBED), jnp.float32)
    emb = emb.at[0].set(0.0)                                        # padding_idx=0

    wih = jax.random.uniform(k_wih, (GATES, EMBED), jnp.float32, -k, k)
    whh = jax.random.uniform(k_whh, (GATES, HIDDEN), jnp.float32, -k, k)
    bih = jax.random.uniform(k_bih, (GATES,), jnp.float32, -k, k)
    bhh = jax.random.uniform(k_bhh, (GATES,), jnp.float32, -k, k)

    wfc = jax.random.uniform(k_wfc, (OUT, HIDDEN), jnp.float32, -k, k)
    bfc = jax.random.uniform(k_bfc, (OUT,), jnp.float32, -k, k)

    return (emb,
            wih.T,                               # (EMBED, 4H)
            whh.T,                               # (HIDDEN, 4H)
            (bih + bhh).reshape(1, GATES),       # (1, 4H)
            wfc.T,                               # (HIDDEN, OUT)
            bfc.reshape(1, OUT))


def ref_forward(ids, params):
    emb, wih_T, whh_T, b, wfc_T, bfc = params
    x = jnp.take(emb, ids, axis=0)               # (T, B, EMBED)
    B = ids.shape[1]

    def step(carry, xt):
        h, c = carry
        gates = xt @ wih_T + h @ whh_T + b
        i_g, f_g, g_g, o_g = jnp.split(gates, 4, axis=-1)
        i_g = jax.nn.sigmoid(i_g)
        f_g = jax.nn.sigmoid(f_g)
        g_g = jnp.tanh(g_g)
        o_g = jax.nn.sigmoid(o_g)
        c = f_g * c + i_g * g_g
        h = o_g * jnp.tanh(c)
        return (h, c), h

    init = (jnp.zeros((B, HIDDEN), jnp.float32), jnp.zeros((B, HIDDEN), jnp.float32))
    _, hs = jax.lax.scan(step, init, x)
    return hs @ wfc_T + bfc


if __name__ == "__main__":
    T, B = 8, 2
    key = jax.random.PRNGKey(0)
    k_params, k_ids = jax.random.split(key)

    params = init_params(k_params)
    ids = jax.random.randint(k_ids, (T, B), 0, VOCAB, dtype=jnp.int32)

    out = jax.block_until_ready(lstm_model_forward(ids, params))
    assert out.shape == (T, B, OUT) and out.dtype == jnp.float32

    ref = jax.block_until_ready(ref_forward(ids, params))
    assert jnp.allclose(out, ref, atol=5e-2, rtol=5e-2), "kernel mismatch vs reference"

    print("KERNEL_OK")
</pallas_src>

<mosaic_0001>
module attributes {stable_mosaic.version = 11 : i64} {
  func.func @proj_kernel(%arg0: i32, %arg1: i32, %arg2: memref<128x128xbf16, #tpu.memory_space<vmem>>, %arg3: memref<128x2048xbf16, #tpu.memory_space<vmem>>, %arg4: memref<1x2048xf32, #tpu.memory_space<vmem>>, %arg5: memref<128x2048xf32, #tpu.memory_space<vmem>>) attributes {dimension_semantics = [#tpu.dimension_semantics<parallel>, #tpu.dimension_semantics<parallel>], iteration_bounds = array<i64: 1, 4>, scalar_prefetch = 0 : i64, scratch_operands = 0 : i64, tpu.core_type = #tpu.core_type<tc>, window_params = [{transform_indices = @transform_0, window_bounds = array<i64: 128, 128>}, {transform_indices = @transform_1, window_bounds = array<i64: 128, 2048>}, {transform_indices = @transform_2, window_bounds = array<i64: 1, 2048>}, {transform_indices = @transform_3, window_bounds = array<i64: 128, 2048>}]} {
    %c0 = arith.constant 0 : index
    %c0_0 = arith.constant 0 : index
    %0 = vector.load %arg2[%c0, %c0_0] : memref<128x128xbf16, #tpu.memory_space<vmem>>, vector<128x128xbf16>
    %c0_1 = arith.constant 0 : index
    %c0_2 = arith.constant 0 : index
    %1 = vector.load %arg3[%c0_1, %c0_2] : memref<128x2048xbf16, #tpu.memory_space<vmem>>, vector<128x2048xbf16>
    %cst = arith.constant dense<0.000000e+00> : vector<128x2048xf32>
    %2 = tpu.matmul %0, %1, %cst {dimension_numbers = #tpu.dot_dimension_numbers<[1], [0], [0], [1], [0, 0, 1, 1], [], []>} : vector<128x128xbf16>, vector<128x2048xbf16>, vector<128x2048xf32> -> vector<128x2048xf32>
    %c0_3 = arith.constant 0 : index
    %c0_4 = arith.constant 0 : index
    %3 = vector.load %arg4[%c0_3, %c0_4] : memref<1x2048xf32, #tpu.memory_space<vmem>>, vector<1x2048xf32>
    %4 = vector.broadcast %3 : vector<1x2048xf32> to vector<128x2048xf32>
    %5 = arith.addf %2, %4 : vector<128x2048xf32>
    %c0_5 = arith.constant 0 : index
    %c0_6 = arith.constant 0 : index
    %6 = vector.load %arg5[%c0_5, %c0_6] : memref<128x2048xf32, #tpu.memory_space<vmem>>, vector<128x2048xf32>
    tpu.vector_store %arg5[%c0_5, %c0_6], %5 {strides = array<i32>} : memref<128x2048xf32, #tpu.memory_space<vmem>>, vector<128x2048xf32>,
    return
  }
  func.func @transform_0(%arg0: i32, %arg1: i32) -> (i32, i32) {
    %c0_i32 = arith.constant 0 : i32
    %c0_i32_0 = arith.constant 0 : i32
    return %arg0, %c0_i32 : i32, i32
  }
  func.func @transform_1(%arg0: i32, %arg1: i32) -> (i32, i32) {
    %c0_i32 = arith.constant 0 : i32
    %c0_i32_0 = arith.constant 0 : i32
    return %c0_i32, %arg1 : i32, i32
  }
  func.func @transform_2(%arg0: i32, %arg1: i32) -> (i32, i32) {
    %c0_i32 = arith.constant 0 : i32
    %c0_i32_0 = arith.constant 0 : i32
    return %c0_i32, %arg1 : i32, i32
  }
  func.func @transform_3(%arg0: i32, %arg1: i32) -> (i32, i32) {
    %c0_i32 = arith.constant 0 : i32
    return %arg0, %arg1 : i32, i32
  }
}

</mosaic_0001>

<llo_original>
// kernel: tpu_custom_call.1
$region0: #{tpu_custom_call.1}
  #allocation0 [shape = 'u32[]', space=smem, size = 0x4, offset = 0x4, fixed_abs, tag = 'smem constant byte address 0x4 - core index']
  #allocation1 [shape = 'u32[144,128]{1,0:T(1,128)}', space=vmem, size = 0x12000, scoped, tag = 'internal scratch']
  %s0 = inlined_call_operand.hbm [shape: bf16[128,128], index: 0, kind: input, shape index: {}]
  %s1 = inlined_call_operand.hbm [shape: bf16[128,8192], index: 1, kind: input, shape index: {}]
  %s2 = inlined_call_operand.hbm [shape: f32[1,8192], index: 2, kind: input, shape index: {}]
  %s3 = inlined_call_operand.hbm [shape: f32[128,8192], index: 3, kind: output, shape index: {}]
  %s4 = sld [smem:[#allocation0]]
  $region57: #{tpu_custom_call.1} parent=0
    _
  %s6 = ssub.s32 1, %s4
  %s7 = scalar_select 0, %s6, %s4
  $region1: #{tpu_custom_call.1} parent=0
    #allocation2 [shape = 'u8[32768]{0}', space=vmem, size = 0x8000, scoped, tag = 'input window, operand 0, single buffered']
    #allocation3 [shape = 's32[2]{0}', space=sflag, size = 0x8, scoped, tag = 'scoped memory for tpu_custom_call.1']
    #allocation4 [shape = 's32[2]{0}', space=sflag, size = 0x8, scoped, tag = 'scoped memory for tpu_custom_call.1']
    #allocation5 [shape = 'u8[1048576]{0}', space=vmem, size = 0x100000, scoped, tag = 'input window, operand 1']
    #allocation6 [shape = 's32[2]{0}', space=sflag, size = 0x8, scoped, tag = 'scoped memory for tpu_custom_call.1']
    #allocation7 [shape = 'u8[16384]{0}', space=vmem, size = 0x4000, scoped, tag = 'input window, operand 2']
    #allocation8 [shape = 'u8[2097152]{0}', space=vmem, size = 0x200000, scoped, tag = 'output window, operand 0']
    %8 = vsyncpa [#allocation3], 0
    %9 = vsyncpa [#allocation6], 0
    %s10 = scalar_lea.sflag [#allocation6], 1
    %11 = vsyncpa %s10, 0
    %12 = vsyncpa [#allocation4], 0
    %s13 = scalar_lea.sflag [#allocation4], 1
    %14 = vsyncpa %s13, 0
    loop: start=0, step=1, limit=6
    $region2: #{tpu_custom_call.1} parent=1 // loop_pre_header
      _
    $region3: #{tpu_custom_call.1} parent=1 // loop_header
      %s16 = sphi 0, %s20
      %p17 = scmp.ge.s32.totalorder %s16, 6
      %s23 = sphi 0, %s35
      %s24 = sphi 0, %s31
      %s25 = sphi 0, %s23
      %s26 = sphi 0, %s24
      %s27 = sphi 0, %s25
      %s28 = sphi 0, %s26
      %s38 = sphi 0, %s40
      %s41 = sphi 0, %s38
      %s42 = sphi 0, %s41
      %s58 = sphi 0, %s42
      %s64 = sphi 0, %s66
      %s67 = sphi 0, %s64
      %s68 = sphi 0, %s67
      %s84 = sphi 0, %s68
      %s90 = sphi 0, %s92
      %s93 = sphi 0, %s90
      %s94 = sphi 0, %s93
      %s110 = sphi 0, %s94
      %s118 = sphi 0, %s120
      %s121 = sphi 0, %s118
      %s122 = sphi 0, %s121
      %s138 = sphi 0, %s122
    $region4: #{tpu_custom_call.1} parent=1 // loop_header_branch
      %19 = sbr.rel (%p17) target = $region8
    $region5: #{tpu_custom_call.1} parent=1 // loop_body
      %s21 = ssub.s32 %s16, 1
      %s22 = ssub.s32 %s16, 2
      %s29 = sadd.s32 1, %s24
      %p30 = scmp.ge.s32.totalorder %s29, 4
      %s31 = scalar_select %p30, 0, %s29
      %s32 = sadd.s32 1, %s23
      %s33 = scalar_select %p30, %s32, %s23
      %p34 = scmp.ge.s32.totalorder %s33, 1
      %s35 = scalar_select %p34, 0, %s33
      %s36 = ssub.s32 %s23, %s35
      %p37 = scmp.eq.s32.totalorder %s36, 0
      %s39 = sadd.s32 %s38, 1
      %s40 = scalar_select %p37, %s38, %s39
      %p43 = pneg %p37
      %p44 = scmp.eq.s32.totalorder %s16, 3
      %p45 = por %p43, %p44
      %p46 = scmp.ne.s32.totalorder %s38, %s41
      %p47 = scmp.eq.s32.totalorder %s16, 0
      %p48 = por %p46, %p47
      %p49 = scmp.ne.s32.totalorder %s38, %s41
      %p50 = scmp.eq.s32.totalorder %s21, 3
      %p51 = por %p49, %p50
      %p52 = scmp.ne.s32.totalorder %s41, %s42
      %p53 = scmp.eq.s32.totalorder %s21, 0
      %p54 = por %p52, %p53
      %p55 = scmp.ne.s32.totalorder %s41, %s42
      %p56 = scmp.eq.s32.totalorder %s22, 3
      %p57 = por %p55, %p56
      %p59 = scmp.ne.s32.totalorder %s42, %s58
      %p60 = scmp.eq.s32.totalorder %s22, 0
      %p61 = por %p59, %p60
      %s62 = ssub.s32 %s24, %s31
      %p63 = scmp.eq.s32.totalorder %s62, 0
      %s65 = sadd.s32 %s64, 1
      %s66 = scalar_select %p63, %s64, %s65
      %p69 = pneg %p63
      %p70 = scmp.eq.s32.totalorder %s16, 3
      %p71 = por %p69, %p70
      %p72 = scmp.ne.s32.totalorder %s64, %s67
      %p73 = scmp.eq.s32.totalorder %s16, 0
      %p74 = por %p72, %p73
      %p75 = scmp.ne.s32.totalorder %s64, %s67
      %p76 = scmp.eq.s32.totalorder %s21, 3
      %p77 = por %p75, %p76
      %p78 = scmp.ne.s32.totalorder %s67, %s68
      %p79 = scmp.eq.s32.totalorder %s21, 0
      %p80 = por %p78, %p79
      %p81 = scmp.ne.s32.totalorder %s67, %s68
      %p82 = scmp.eq.s32.totalorder %s22, 3
      %p83 = por %p81, %p82
      %p85 = scmp.ne.s32.totalorder %s68, %s84
      %p86 = scmp.eq.s32.totalorder %s22, 0
      %p87 = por %p85, %p86
      %s88 = ssub.s32 %s24, %s31
      %p89 = scmp.eq.s32.totalorder %s88, 0
      %s91 = sadd.s32 %s90, 1
      %s92 = scalar_select %p89, %s90, %s91
      %p95 = pneg %p89
      %p96 = scmp.eq.s32.totalorder %s16, 3
      %p97 = por %p95, %p96
      %p98 = scmp.ne.s32.totalorder %s90, %s93
      %p99 = scmp.eq.s32.totalorder %s16, 0
      %p100 = por %p98, %p99
      %p101 = scmp.ne.s32.totalorder %s90, %s93
      %p102 = scmp.eq.s32.totalorder %s21, 3
      %p103 = por %p101, %p102
      %p104 = scmp.ne.s32.totalorder %s93, %s94
      %p105 = scmp.eq.s32.totalorder %s21, 0
      %p106 = por %p104, %p105
      %p107 = scmp.ne.s32.totalorder %s93, %s94
      %p108 = scmp.eq.s32.totalorder %s22, 3
      %p109 = por %p107, %p108
      %p111 = scmp.ne.s32.totalorder %s94, %s110
      %p112 = scmp.eq.s32.totalorder %s22, 0
      %p113 = por %p111, %p112
      %s114 = ssub.s32 %s23, %s35
      %s115 = ssub.s32 %s24, %s31
      %s116 = sor.u32 %s114, %s115
      %p117 = scmp.eq.s32.totalorder %s116, 0
      %s119 = sadd.s32 %s118, 1
      %s120 = scalar_select %p117, %s118, %s119
      %p123 = pneg %p117
      %p124 = scmp.eq.s32.totalorder %s16, 3
      %p125 = por %p123, %p124
      %p126 = scmp.ne.s32.totalorder %s118, %s121
      %p127 = scmp.eq.s32.totalorder %s16, 0
      %p128 = por %p126, %p127
      %p129 = scmp.ne.s32.totalorder %s118, %s121
      %p130 = scmp.eq.s32.totalorder %s21, 3
      %p131 = por %p129, %p130
      %p132 = scmp.ne.s32.totalorder %s121, %s122
      %p133 = scmp.eq.s32.totalorder %s21, 0
      %p134 = por %p132, %p133
      %p135 = scmp.ne.s32.totalorder %s121, %s122
      %p136 = scmp.eq.s32.totalorder %s22, 3
      %p137 = por %p135, %p136
      %p139 = scmp.ne.s32.totalorder %s122, %s138
      %p140 = scmp.eq.s32.totalorder %s22, 0
      %p141 = por %p139, %p140
      %p142 = scmp.le.s32.totalorder 1, %s16
      %p143 = scmp.lt.s32.totalorder %s16, 5
      %p144 = pnand %p142, %p143
      %p145 = pneg %p144
      // Predicated region
      $region9: #{tpu_custom_call.1} parent=5 // pred_check
        _
      $region10: #{tpu_custom_call.1} parent=5 // pred_check_branch
        %147 = sbr.rel (%p144) target = $region12
      $region11: #{tpu_custom_call.1} parent=5 // pred_region
        %s148 = ssub.s32 %s16, 1
        // Predicated region
        $region13: #{tpu_custom_call.1} parent=11 // pred_check
          %p149 = pneg %p54
        $region14: #{tpu_custom_call.1} parent=11 // pred_check_branch
          %151 = sbr.rel (%p149) target = $region16
        $region15: #{tpu_custom_call.1} parent=11 // pred_region
          %s152 = smul.u32 16, %s25
          %s154 = ssub.s32 1024, 1024
          %155 = vsyncadd [#allocation3], %s154
          %s156 = smul.addr %s152, 64
          %s157 = scalar_lea.hbm %s0, %s156
          %s158 = sshll.u32 [#allocation2], 4
          %s159 = int_to_ptr.vmem [resolvable:$true] %s158
          %164 = dma.hbm_to_vmem [thread:$0]  %s157, 1024, %s159, [#allocation3], 64, 64, 4
        $region16: #{tpu_custom_call.1} parent=11 // pred_fallthru
          _
      $region12: #{tpu_custom_call.1} parent=5 // pred_fallthru
        _
      %p165 = scmp.lt.s32.totalorder %s16, 4
      // Predicated region
      $region17: #{tpu_custom_call.1} parent=5 // pred_check
        %p166 = pneg %p165
      $region18: #{tpu_custom_call.1} parent=5 // pred_check_branch
        %168 = sbr.rel (%p166) target = $region20
      $region19: #{tpu_custom_call.1} parent=5 // pred_region
        // Predicated region
        $region21: #{tpu_custom_call.1} parent=19 // pred_check
          %p169 = pneg %p74
        $region22: #{tpu_custom_call.1} parent=19 // pred_check_branch
          %171 = sbr.rel (%p169) target = $region24
        $region23: #{tpu_custom_call.1} parent=19 // pred_region
          %s172 = sand.u32 %s16, 1
          %s173 = scalar_lea.sflag [#allocation6], %s172
          %s174 = sand.u32 %s64, 1
          %s175 = smul.addr %s174, 1024
          %s176 = scalar_lea.vmem [#allocation5], %s175
          %s177 = smul.u32 16, %s24
          %s179 = ssub.s32 16384, 16384
          %180 = vsyncadd %s173, %s179
          %s181 = smul.addr %s177, 64
          %s182 = scalar_lea.hbm %s1, %s181
          %s183 = sshll.u32 %s176, 4
          %s184 = int_to_ptr.vmem [resolvable:$true] %s183
          %189 = dma.hbm_to_vmem [thread:$0]  %s182, 16384, %s184, %s173, 4096, 1024, 64
        $region24: #{tpu_custom_call.1} parent=19 // pred_fallthru
          _
        // Predicated region
        $region25: #{tpu_custom_call.1} parent=19 // pred_check
          %p190 = pneg %p100
        $region26: #{tpu_custom_call.1} parent=19 // pred_check_branch
          %192 = sbr.rel (%p190) target = $region28
        $region27: #{tpu_custom_call.1} parent=19 // pred_region
          %s193 = sand.u32 %s16, 1
          %s194 = scalar_lea.sflag [#allocation6], %s193
          %s195 = sand.u32 %s90, 1
          %s196 = smul.addr %s195, 16
          %s197 = scalar_lea.vmem [#allocation7], %s196
          %s198 = smul.u32 16, %s24
          %s200 = ssub.s32 256, 256
          %201 = vsyncadd %s194, %s200
          %s202 = smul.addr %s198, 16
          %s203 = scalar_lea.hbm %s2, %s202
          %s205 = sshll.u32 %s197, 4
          %s206 = int_to_ptr.vmem [resolvable:$true] %s205
          %208 = dma.hbm_to_vmem [thread:$0]  %s203, 256, %s206, %s194
        $region28: #{tpu_custom_call.1} parent=19 // pred_fallthru
          _
      $region20: #{tpu_custom_call.1} parent=5 // pred_fallthru
        _
      %p209 = scmp.le.s32.totalorder 1, %s16
      %p210 = scmp.lt.s32.totalorder %s16, 5
      %p211 = pnand %p209, %p210
      %p212 = pneg %p211
      // Predicated region
      $region29: #{tpu_custom_call.1} parent=5 // pred_check
        _
      $region30: #{tpu_custom_call.1} parent=5 // pred_check_branch
        %214 = sbr.rel (%p211) target = $region32
      $region31: #{tpu_custom_call.1} parent=5 // pred_region
        %s215 = ssub.s32 %s16, 1
        // Predicated region
        $region33: #{tpu_custom_call.1} parent=31 // pred_check
          %p216 = pneg %p54
        $region34: #{tpu_custom_call.1} parent=31 // pred_check_branch
          %218 = sbr.rel (%p216) target = $region36
        $region35: #{tpu_custom_call.1} parent=31 // pred_region
          %219 = dma.done [#allocation3], 1024
        $region36: #{tpu_custom_call.1} parent=31 // pred_fallthru
          _
        %s220 = sand.u32 %s21, 1
        %s221 = scalar_lea.sflag [#allocation6], %s220
        %s222 = sand.u32 %s67, 1
        %s223 = smul.addr %s222, 1024
        %s224 = scalar_lea.vmem [#allocation5], %s223
        // Predicated region
        $region37: #{tpu_custom_call.1} parent=31 // pred_check
          %p225 = pneg %p80
        $region38: #{tpu_custom_call.1} parent=31 // pred_check_branch
          %227 = sbr.rel (%p225) target = $region40
        $region39: #{tpu_custom_call.1} parent=31 // pred_region
          %228 = dma.done %s221, 16384
        $region40: #{tpu_custom_call.1} parent=31 // pred_fallthru
          _
        %s229 = sand.u32 %s21, 1
        %s230 = scalar_lea.sflag [#allocation6], %s229
        %s231 = sand.u32 %s93, 1
        %s232 = smul.addr %s231, 16
        %s233 = scalar_lea.vmem [#allocation7], %s232
        // Predicated region
        $region41: #{tpu_custom_call.1} parent=31 // pred_check
          %p234 = pneg %p106
        $region42: #{tpu_custom_call.1} parent=31 // pred_check_branch
          %236 = sbr.rel (%p234) target = $region44
        $region43: #{tpu_custom_call.1} parent=31 // pred_region
          %237 = dma.done %s230, 256
        $region44: #{tpu_custom_call.1} parent=31 // pred_fallthru
          _
        %p238 = pneg %p54
        %p239 = pneg %p51
        %s240 = sand.u32 %s21, 1
        %s241 = scalar_lea.sflag [#allocation6], %s240
        %s242 = sand.u32 %s67, 1
        %s243 = smul.addr %s242, 1024
        %s244 = scalar_lea.vmem [#allocation5], %s243
        %p245 = pneg %p80
        %p246 = pneg %p77
        %s247 = sand.u32 %s21, 1
        %s248 = scalar_lea.sflag [#allocation6], %s247
        %s249 = sand.u32 %s93, 1
        %s250 = smul.addr %s249, 16
        %s251 = scalar_lea.vmem [#allocation7], %s250
        %p252 = pneg %p106
        %p253 = pneg %p103
        %p254 = pneg %p134
        %p255 = pneg %p131
        %s256 = sand.u32 %s121, 1
        %s257 = scalar_lea.sflag [#allocation4], %s256
        %s258 = sand.u32 %s121, 1
        %s259 = smul.addr %s258, 2048
        %s260 = scalar_lea.vmem [#allocation8], %s259
        %s261 = smul.u32 16, %s25
        %s262 = smul.u32 16, %s26
        %s263 = smul.u32 16, %s26
        %s264 = smul.u32 16, %s25
        %s265 = smul.u32 16, %s26
        %v267 = vld [vmem:[#allocation2] sm:$0xf]
        %v268 = vld [vmem:[#allocation2 + $0x4] sm:$0xf]
        %v269 = vld [vmem:[#allocation2 + $0x8] sm:$0xf]
        %v270 = vld [vmem:[#allocation2 + $0xc] sm:$0xf]
        %v271 = vld [vmem:[#allocation2 + $0x10] sm:$0xf]
        %v272 = vld [vmem:[#allocation2 + $0x14] sm:$0xf]
        %v273 = vld [vmem:[#allocation2 + $0x18] sm:$0xf]
        %v274 = vld [vmem:[#allocation2 + $0x1c] sm:$0xf]
        %v275 = vld [vmem:[#allocation2 + $0x20] sm:$0xf]
        %v276 = vld [vmem:[#allocation2 + $0x24] sm:$0xf]
        %v277 = vld [vmem:[#allocation2 + $0x28] sm:$0xf]
        %v278 = vld [vmem:[#allocation2 + $0x2c] sm:$0xf]
        %v279 = vld [vmem:[#allocation2 + $0x30] sm:$0xf]
        %v280 = vld [vmem:[#allocation2 + $0x34] sm:$0xf]
        %v281 = vld [vmem:[#allocation2 + $0x38] sm:$0xf]
        %v282 = vld [vmem:[#allocation2 + $0x3c] sm:$0xf]
        %v283 = vld [vmem:[%s224] sm:$0xff]
        %v284 = vld [vmem:[%s224 + $0x8] sm:$0xff]
        %v285 = vld [vmem:[%s224 + $0x10] sm:$0xff]
        %v286 = vld [vmem:[%s224 + $0x18] sm:$0xff]
        %v287 = vld [vmem:[%s224 + $0x20] sm:$0xff]
        %v288 = vld [vmem:[%s224 + $0x28] sm:$0xff]
        %v289 = vld [vmem:[%s224 + $0x30] sm:$0xff]
        %v290 = vld [vmem:[%s224 + $0x38] sm:$0xff]
        %v291 = vld [vmem:[%s224 + $0x40] sm:$0xff]
        %v292 = vld [vmem:[%s224 + $0x48] sm:$0xff]
        %v293 = vld [vmem:[%s224 + $0x50] sm:$0xff]
        %v294 = vld [vmem:[%s224 + $0x58] sm:$0xff]
        %v295 = vld [vmem:[%s224 + $0x60] sm:$0xff]
        %v296 = vld [vmem:[%s224 + $0x68] sm:$0xff]
        %v297 = vld [vmem:[%s224 + $0x70] sm:$0xff]
        %v298 = vld [vmem:[%s224 + $0x78] sm:$0xff]
        %v299 = vld [vmem:[%s224 + $0x80] sm:$0xff]
        %v300 = vld [vmem:[%s224 + $0x88] sm:$0xff]
        %v301 = vld [vmem:[%s224 + $0x90] sm:$0xff]
        %v302 = vld [vmem:[%s224 + $0x98] sm:$0xff]
        %v303 = vld [vmem:[%s224 + $0xa0] sm:$0xff]
        %v304 = vld [vmem:[%s224 + $0xa8] sm:$0xff]
        %v305 = vld [vmem:[%s224 + $0xb0] sm:$0xff]
        %v306 = vld [vmem:[%s224 + $0xb8] sm:$0xff]
        %v307 = vld [vmem:[%s224 + $0xc0] sm:$0xff]
        %v308 = vld [vmem:[%s224 + $0xc8] sm:$0xff]
        %v309 = vld [vmem:[%s224 + $0xd0] sm:$0xff]
        %v310 = vld [vmem:[%s224 + $0xd8] sm:$0xff]
        %v311 = vld [vmem:[%s224 + $0xe0] sm:$0xff]
        %v312 = vld [vmem:[%s224 + $0xe8] sm:$0xff]
        %v313 = vld [vmem:[%s224 + $0xf0] sm:$0xff]
        %v314 = vld [vmem:[%s224 + $0xf8] sm:$0xff]
        %v315 = vld [vmem:[%s224 + $0x100] sm:$0xff]
        %v316 = vld [vmem:[%s224 + $0x108] sm:$0xff]
        %v317 = vld [vmem:[%s224 + $0x110] sm:$0xff]
        %v318 = vld [vmem:[%s224 + $0x118] sm:$0xff]
        %v319 = vld [vmem:[%s224 + $0x120] sm:$0xff]
        %v320 = vld [vmem:[%s224 + $0x128] sm:$0xff]
        %v321 = vld [vmem:[%s224 + $0x130] sm:$0xff]
        %v322 = vld [vmem:[%s224 + $0x138] sm:$0xff]
        %v323 = vld [vmem:[%s224 + $0x140] sm:$0xff]
        %v324 = vld [vmem:[%s224 + $0x148] sm:$0xff]
        %v325 = vld [vmem:[%s224 + $0x150] sm:$0xff]
        %v326 = vld [vmem:[%s224 + $0x158] sm:$0xff]
        %v327 = vld [vmem:[%s224 + $0x160] sm:$0xff]
        %v328 = vld [vmem:[%s224 + $0x168] sm:$0xff]
        %v329 = vld [vmem:[%s224 + $0x170] sm:$0xff]
        %v330 = vld [vmem:[%s224 + $0x178] sm:$0xff]
        %v331 = vld [vmem:[%s224 + $0x180] sm:$0xff]
        %v332 = vld [vmem:[%s224 + $0x188] sm:$0xff]
        %v333 = vld [vmem:[%s224 + $0x190] sm:$0xff]
        %v334 = vld [vmem:[%s224 + $0x198] sm:$0xff]
        %v335 = vld [vmem:[%s224 + $0x1a0] sm:$0xff]
        %v336 = vld [vmem:[%s224 + $0x1a8] sm:$0xff]
        %v337 = vld [vmem:[%s224 + $0x1b0] sm:$0xff]
        %v338 = vld [vmem:[%s224 + $0x1b8] sm:$0xff]
        %v339 = vld [vmem:[%s224 + $0x1c0] sm:$0xff]
        %v340 = vld [vmem:[%s224 + $0x1c8] sm:$0xff]
        %v341 = vld [vmem:[%s224 + $0x1d0] sm:$0xff]
        %v342 = vld [vmem:[%s224 + $0x1d8] sm:$0xff]
        %v343 = vld [vmem:[%s224 + $0x1e0] sm:$0xff]
        %v344 = vld [vmem:[%s224 + $0x1e8] sm:$0xff]
        %v345 = vld [vmem:[%s224 + $0x1f0] sm:$0xff]
        %v346 = vld [vmem:[%s224 + $0x1f8] sm:$0xff]
        %v347 = vld [vmem:[%s224 + $0x200] sm:$0xff]
        %v348 = vld [vmem:[%s224 + $0x208] sm:$0xff]
        %v349 = vld [vmem:[%s224 + $0x210] sm:$0xff]
        %v350 = vld [vmem:[%s224 + $0x218] sm:$0xff]
        %v351 = vld [vmem:[%s224 + $0x220] sm:$0xff]
        %v352 = vld [vmem:[%s224 + $0x228] sm:$0xff]
        %v353 = vld [vmem:[%s224 + $0x230] sm:$0xff]
        %v354 = vld [vmem:[%s224 + $0x238] sm:$0xff]
        %v355 = vld [vmem:[%s224 + $0x240] sm:$0xff]
        %v356 = vld [vmem:[%s224 + $0x248] sm:$0xff]
        %v357 = vld [vmem:[%s224 + $0x250] sm:$0xff]
        %v358 = vld [vmem:[%s224 + $0x258] sm:$0xff]
        %v359 = vld [vmem:[%s224 + $0x260] sm:$0xff]
        %v360 = vld [vmem:[%s224 + $0x268] sm:$0xff]
        %v361 = vld [vmem:[%s224 + $0x270] sm:$0xff]
        %v362 = vld [vmem:[%s224 + $0x278] sm:$0xff]
        %v363 = vld [vmem:[%s224 + $0x280] sm:$0xff]
        %v364 = vld [vmem:[%s224 + $0x288] sm:$0xff]
        %v365 = vld [vmem:[%s224 + $0x290] sm:$0xff]
        %v366 = vld [vmem:[%s224 + $0x298] sm:$0xff]
        %v367 = vld [vmem:[%s224 + $0x2a0] sm:$0xff]
        %v368 = vld [vmem:[%s224 + $0x2a8] sm:$0xff]
        %v369 = vld [vmem:[%s224 + $0x2b0] sm:$0xff]
        %v370 = vld [vmem:[%s224 + $0x2b8] sm:$0xff]
        %v371 = vld [vmem:[%s224 + $0x2c0] sm:$0xff]
        %v372 = vld [vmem:[%s224 + $0x2c8] sm:$0xff]
        %v373 = vld [vmem:[%s224 + $0x2d0] sm:$0xff]
        %v374 = vld [vmem:[%s224 + $0x2d8] sm:$0xff]
        %v375 = vld [vmem:[%s224 + $0x2e0] sm:$0xff]
        %v376 = vld [vmem:[%s224 + $0x2e8] sm:$0xff]
        %v377 = vld [vmem:[%s224 + $0x2f0] sm:$0xff]
        %v378 = vld [vmem:[%s224 + $0x2f8] sm:$0xff]
        %v379 = vld [vmem:[%s224 + $0x300] sm:$0xff]
        %v380 = vld [vmem:[%s224 + $0x308] sm:$0xff]
        %v381 = vld [vmem:[%s224 + $0x310] sm:$0xff]
        %v382 = vld [vmem:[%s224 + $0x318] sm:$0xff]
        %v383 = vld [vmem:[%s224 + $0x320] sm:$0xff]
        %v384 = vld [vmem:[%s224 + $0x328] sm:$0xff]
        %v385 = vld [vmem:[%s224 + $0x330] sm:$0xff]
        %v386 = vld [vmem:[%s224 + $0x338] sm:$0xff]
        %v387 = vld [vmem:[%s224 + $0x340] sm:$0xff]
        %v388 = vld [vmem:[%s224 + $0x348] sm:$0xff]
        %v389 = vld [vmem:[%s224 + $0x350] sm:$0xff]
        %v390 = vld [vmem:[%s224 + $0x358] sm:$0xff]
        %v391 = vld [vmem:[%s224 + $0x360] sm:$0xff]
        %v392 = vld [vmem:[%s224 + $0x368] sm:$0xff]
        %v393 = vld [vmem:[%s224 + $0x370] sm:$0xff]
        %v394 = vld [vmem:[%s224 + $0x378] sm:$0xff]
        %v395 = vld [vmem:[%s224 + $0x380] sm:$0xff]
        %v396 = vld [vmem:[%s224 + $0x388] sm:$0xff]
        %v397 = vld [vmem:[%s224 + $0x390] sm:$0xff]
        %v398 = vld [vmem:[%s224 + $0x398] sm:$0xff]
        %v399 = vld [vmem:[%s224 + $0x3a0] sm:$0xff]
        %v400 = vld [vmem:[%s224 + $0x3a8] sm:$0xff]
        %v401 = vld [vmem:[%s224 + $0x3b0] sm:$0xff]
        %v402 = vld [vmem:[%s224 + $0x3b8] sm:$0xff]
        %v403 = vld [vmem:[%s224 + $0x3c0] sm:$0xff]
        %v404 = vld [vmem:[%s224 + $0x3c8] sm:$0xff]
        %v405 = vld [vmem:[%s224 + $0x3d0] sm:$0xff]
        %v406 = vld [vmem:[%s224 + $0x3d8] sm:$0xff]
        %v407 = vld [vmem:[%s224 + $0x3e0] sm:$0xff]
        %v408 = vld [vmem:[%s224 + $0x3e8] sm:$0xff]
        %v409 = vld [vmem:[%s224 + $0x3f0] sm:$0xff]
        %v410 = vld [vmem:[%s224 + $0x3f8] sm:$0xff]
        %v411 = vld [vmem:[%s233] sm:$0xff]
        %v412 = vld [vmem:[%s233 + $0x8] sm:$0xff]
        %v415 = vlaneseq
        %v416 = vshrl.u32 %v415, 7
        %v417 = vsub.s32 0, %v416
        %v418 = vrot.slane %v411, %v417
        %v419 = vlaneseq
        %v420 = vshrl.u32 %v419, 7
        %v421 = vsub.s32 1, %v420
        %v422 = vrot.slane %v411, %v421
        %v423 = vlaneseq
        %v424 = vshrl.u32 %v423, 7
        %v425 = vsub.s32 2, %v424
        %v426 = vrot.slane %v411, %v425
        %v427 = vlaneseq
        %v428 = vshrl.u32 %v427, 7
        %v429 = vsub.s32 3, %v428
        %v430 = vrot.slane %v411, %v429
        %v431 = vlaneseq
        %v432 = vshrl.u32 %v431, 7
        %v433 = vsub.s32 4, %v432
        %v434 = vrot.slane %v411, %v433
        %v435 = vlaneseq
        %v436 = vshrl.u32 %v435, 7
        %v437 = vsub.s32 5, %v436
        %v438 = vrot.slane %v411, %v437
        %v439 = vlaneseq
        %v440 = vshrl.u32 %v439, 7
        %v441 = vsub.s32 6, %v440
        %v442 = vrot.slane %v411, %v441
        %v443 = vlaneseq
        %v444 = vshrl.u32 %v443, 7
        %v445 = vsub.s32 7, %v444
        %v446 = vrot.slane %v411, %v445
        %v447 = vlaneseq
        %v448 = vshrl.u32 %v447, 7
        %v449 = vsub.s32 0, %v448
        %v450 = vrot.slane %v412, %v449
        %v451 = vlaneseq
        %v452 = vshrl.u32 %v451, 7
        %v453 = vsub.s32 1, %v452
        %v454 = vrot.slane %v412, %v453
        %v455 = vlaneseq
        %v456 = vshrl.u32 %v455, 7
        %v457 = vsub.s32 2, %v456
        %v458 = vrot.slane %v412, %v457
        %v459 = vlaneseq
        %v460 = vshrl.u32 %v459, 7
        %v461 = vsub.s32 3, %v460
        %v462 = vrot.slane %v412, %v461
        %v463 = vlaneseq
        %v464 = vshrl.u32 %v463, 7
        %v465 = vsub.s32 4, %v464
        %v466 = vrot.slane %v412, %v465
        %v467 = vlaneseq
        %v468 = vshrl.u32 %v467, 7
        %v469 = vsub.s32 5, %v468
        %v470 = vrot.slane %v412, %v469
        %v471 = vlaneseq
        %v472 = vshrl.u32 %v471, 7
        %v473 = vsub.s32 6, %v472
        %v474 = vrot.slane %v412, %v473
        %v475 = vlaneseq
        %v476 = vshrl.u32 %v475, 7
        %v477 = vsub.s32 7, %v476
        %v478 = vrot.slane %v412, %v477
        %v511 = vunpack.c.l.b16 %v267
        %v512 = vunpack.c.l.b16 %v268
        %v513 = vunpack.c.l.b16 %v269
        %v514 = vunpack.c.l.b16 %v270
        %v515 = vunpack.c.l.b16 %v271
        %v516 = vunpack.c.l.b16 %v272
        %v517 = vunpack.c.l.b16 %v273
        %v518 = vunpack.c.l.b16 %v274
        %v519 = vunpack.c.l.b16 %v275
        %v520 = vunpack.c.l.b16 %v276
        %v521 = vunpack.c.l.b16 %v277
        %v522 = vunpack.c.l.b16 %v278
        %v523 = vunpack.c.l.b16 %v279
        %v524 = vunpack.c.l.b16 %v280
        %v525 = vunpack.c.l.b16 %v281
        %v526 = vunpack.c.l.b16 %v282
        %v527 = vpack.c.b16 %v512, %v511
        %v528 = vpack.c.b16 %v514, %v513
        %v529 = vpack.c.b16 %v516, %v515
        %v530 = vpack.c.b16 %v518, %v517
        %v531 = vpack.c.b16 %v520, %v519
        %v532 = vpack.c.b16 %v522, %v521
        %v533 = vpack.c.b16 %v524, %v523
        %v534 = vpack.c.b16 %v526, %v525
        %v671 = vunpack.c.l.b16 %v283
        %v672 = vunpack.c.h.b16 %v283
        %v673 = vunpack.c.l.b16 %v284
        %v674 = vunpack.c.h.b16 %v284
        %v675 = vunpack.c.l.b16 %v285
        %v676 = vunpack.c.h.b16 %v285
        %v677 = vunpack.c.l.b16 %v286
        %v678 = vunpack.c.h.b16 %v286
        %v679 = vunpack.c.l.b16 %v287
        %v680 = vunpack.c.h.b16 %v287
        %v681 = vunpack.c.l.b16 %v288
        %v682 = vunpack.c.h.b16 %v288
        %v683 = vunpack.c.l.b16 %v289
        %v684 = vunpack.c.h.b16 %v289
        %v685 = vunpack.c.l.b16 %v290
        %v686 = vunpack.c.h.b16 %v290
        %v687 = vunpack.c.l.b16 %v291
        %v688 = vunpack.c.h.b16 %v291
        %v689 = vunpack.c.l.b16 %v292
        %v690 = vunpack.c.h.b16 %v292
        %v691 = vunpack.c.l.b16 %v293
        %v692 = vunpack.c.h.b16 %v293
        %v693 = vunpack.c.l.b16 %v294
        %v694 = vunpack.c.h.b16 %v294
        %v695 = vunpack.c.l.b16 %v295
        %v696 = vunpack.c.h.b16 %v295
        %v697 = vunpack.c.l.b16 %v296
        %v698 = vunpack.c.h.b16 %v296
        %v699 = vunpack.c.l.b16 %v297
        %v700 = vunpack.c.h.b16 %v297
        %v701 = vunpack.c.l.b16 %v298
        %v702 = vunpack.c.h.b16 %v298
        %v703 = vunpack.c.l.b16 %v299
        %v704 = vunpack.c.h.b16 %v299
        %v705 = vunpack.c.l.b16 %v300
        %v706 = vunpack.c.h.b16 %v300
        %v707 = vunpack.c.l.b16 %v301
        %v708 = vunpack.c.h.b16 %v301
        %v709 = vunpack.c.l.b16 %v302
        %v710 = vunpack.c.h.b16 %v302
        %v711 = vunpack.c.l.b16 %v303
        %v712 = vunpack.c.h.b16 %v303
        %v713 = vunpack.c.l.b16 %v304
        %v714 = vunpack.c.h.b16 %v304
        %v715 = vunpack.c.l.b16 %v305
        %v716 = vunpack.c.h.b16 %v305
        %v717 = vunpack.c.l.b16 %v306
        %v718 = vunpack.c.h.b16 %v306
        %v719 = vunpack.c.l.b16 %v307
        %v720 = vunpack.c.h.b16 %v307
        %v721 = vunpack.c.l.b16 %v308
        %v722 = vunpack.c.h.b16 %v308
        %v723 = vunpack.c.l.b16 %v309
        %v724 = vunpack.c.h.b16 %v309
        %v725 = vunpack.c.l.b16 %v310
        %v726 = vunpack.c.h.b16 %v310
        %v727 = vunpack.c.l.b16 %v311
        %v728 = vunpack.c.h.b16 %v311
        %v729 = vunpack.c.l.b16 %v312
        %v730 = vunpack.c.h.b16 %v312
        %v731 = vunpack.c.l.b16 %v313
        %v732 = vunpack.c.h.b16 %v313
        %v733 = vunpack.c.l.b16 %v314
        %v734 = vunpack.c.h.b16 %v314
        %v735 = vunpack.c.l.b16 %v315
        %v736 = vunpack.c.h.b16 %v315
        %v737 = vunpack.c.l.b16 %v316
        %v738 = vunpack.c.h.b16 %v316
        %v739 = vunpack.c.l.b16 %v317
        %v740 = vunpack.c.h.b16 %v317
        %v741 = vunpack.c.l.b16 %v318
        %v742 = vunpack.c.h.b16 %v318
        %v743 = vunpack.c.l.b16 %v319
        %v744 = vunpack.c.h.b16 %v319
        %v745 = vunpack.c.l.b16 %v320
        %v746 = vunpack.c.h.b16 %v320
        %v747 = vunpack.c.l.b16 %v321
        %v748 = vunpack.c.h.b16 %v321
        %v749 = vunpack.c.l.b16 %v322
        %v750 = vunpack.c.h.b16 %v322
        %v751 = vunpack.c.l.b16 %v323
        %v752 = vunpack.c.h.b16 %v323
        %v753 = vunpack.c.l.b16 %v324
        %v754 = vunpack.c.h.b16 %v324
        %v755 = vunpack.c.l.b16 %v325
        %v756 = vunpack.c.h.b16 %v325
        %v757 = vunpack.c.l.b16 %v326
        %v758 = vunpack.c.h.b16 %v326
        %v759 = vunpack.c.l.b16 %v327
        %v760 = vunpack.c.h.b16 %v327
        %v761 = vunpack.c.l.b16 %v328
        %v762 = vunpack.c.h.b16 %v328
        %v763 = vunpack.c.l.b16 %v329
        %v764 = vunpack.c.h.b16 %v329
        %v765 = vunpack.c.l.b16 %v330
        %v766 = vunpack.c.h.b16 %v330
        %v767 = vunpack.c.l.b16 %v331
        %v768 = vunpack.c.h.b16 %v331
        %v769 = vunpack.c.l.b16 %v332
        %v770 = vunpack.c.h.b16 %v332
        %v771 = vunpack.c.l.b16 %v333
        %v772 = vunpack.c.h.b16 %v333
        %v773 = vunpack.c.l.b16 %v334
        %v774 = vunpack.c.h.b16 %v334
        %v775 = vunpack.c.l.b16 %v335
        %v776 = vunpack.c.h.b16 %v335
        %v777 = vunpack.c.l.b16 %v336
        %v778 = vunpack.c.h.b16 %v336
        %v779 = vunpack.c.l.b16 %v337
        %v780 = vunpack.c.h.b16 %v337
        %v781 = vunpack.c.l.b16 %v338
        %v782 = vunpack.c.h.b16 %v338
        %v783 = vunpack.c.l.b16 %v339
        %v784 = vunpack.c.h.b16 %v339
        %v785 = vunpack.c.l.b16 %v340
        %v786 = vunpack.c.h.b16 %v340
        %v787 = vunpack.c.l.b16 %v341
        %v788 = vunpack.c.h.b16 %v341
        %v789 = vunpack.c.l.b16 %v342
        %v790 = vunpack.c.h.b16 %v342
        %v791 = vunpack.c.l.b16 %v343
        %v792 = vunpack.c.h.b16 %v343
        %v793 = vunpack.c.l.b16 %v344
        %v794 = vunpack.c.h.b16 %v344
        %v795 = vunpack.c.l.b16 %v345
        %v796 = vunpack.c.h.b16 %v345
        %v797 = vunpack.c.l.b16 %v346
        %v798 = vunpack.c.h.b16 %v346
        %v799 = vunpack.c.l.b16 %v347
        %v800 = vunpack.c.h.b16 %v347
        %v801 = vunpack.c.l.b16 %v348
        %v802 = vunpack.c.h.b16 %v348
        %v803 = vunpack.c.l.b16 %v349
        %v804 = vunpack.c.h.b16 %v349
        %v805 = vunpack.c.l.b16 %v350
        %v806 = vunpack.c.h.b16 %v350
        %v807 = vunpack.c.l.b16 %v351
        %v808 = vunpack.c.h.b16 %v351
        %v809 = vunpack.c.l.b16 %v352
        %v810 = vunpack.c.h.b16 %v352
        %v811 = vunpack.c.l.b16 %v353
        %v812 = vunpack.c.h.b16 %v353
        %v813 = vunpack.c.l.b16 %v354
        %v814 = vunpack.c.h.b16 %v354
        %v815 = vunpack.c.l.b16 %v355
        %v816 = vunpack.c.h.b16 %v355
        %v817 = vunpack.c.l.b16 %v356
        %v818 = vunpack.c.h.b16 %v356
        %v819 = vunpack.c.l.b16 %v357
        %v820 = vunpack.c.h.b16 %v357
        %v821 = vunpack.c.l.b16 %v358
        %v822 = vunpack.c.h.b16 %v358
        %v823 = vunpack.c.l.b16 %v359
        %v824 = vunpack.c.h.b16 %v359
        %v825 = vunpack.c.l.b16 %v360
        %v826 = vunpack.c.h.b16 %v360
        %v827 = vunpack.c.l.b16 %v361
        %v828 = vunpack.c.h.b16 %v361
        %v829 = vunpack.c.l.b16 %v362
        %v830 = vunpack.c.h.b16 %v362
        %v831 = vunpack.c.l.b16 %v363
        %v832 = vunpack.c.h.b16 %v363
        %v833 = vunpack.c.l.b16 %v364
        %v834 = vunpack.c.h.b16 %v364
        %v835 = vunpack.c.l.b16 %v365
        %v836 = vunpack.c.h.b16 %v365
        %v837 = vunpack.c.l.b16 %v366
        %v838 = vunpack.c.h.b16 %v366
        %v839 = vunpack.c.l.b16 %v367
        %v840 = vunpack.c.h.b16 %v367
        %v841 = vunpack.c.l.b16 %v368
        %v842 = vunpack.c.h.b16 %v368
        %v843 = vunpack.c.l.b16 %v369
        %v844 = vunpack.c.h.b16 %v369
        %v845 = vunpack.c.l.b16 %v370
        %v846 = vunpack.c.h.b16 %v370
        %v847 = vunpack.c.l.b16 %v371
        %v848 = vunpack.c.h.b16 %v371
        %v849 = vunpack.c.l.b16 %v372
        %v850 = vunpack.c.h.b16 %v372
        %v851 = vunpack.c.l.b16 %v373
        %v852 = vunpack.c.h.b16 %v373
        %v853 = vunpack.c.l.b16 %v374
        %v854 = vunpack.c.h.b16 %v374
        %v855 = vunpack.c.l.b16 %v375
        %v856 = vunpack.c.h.b16 %v375
        %v857 = vunpack.c.l.b16 %v376
        %v858 = vunpack.c.h.b16 %v376
        %v859 = vunpack.c.l.b16 %v377
        %v860 = vunpack.c.h.b16 %v377
        %v861 = vunpack.c.l.b16 %v378
        %v862 = vunpack.c.h.b16 %v378
        %v863 = vunpack.c.l.b16 %v379
        %v864 = vunpack.c.h.b16 %v379
        %v865 = vunpack.c.l.b16 %v380
        %v866 = vunpack.c.h.b16 %v380
        %v867 = vunpack.c.l.b16 %v381
        %v868 = vunpack.c.h.b16 %v381
        %v869 = vunpack.c.l.b16 %v382
        %v870 = vunpack.c.h.b16 %v382
        %v871 = vunpack.c.l.b16 %v383
        %v872 = vunpack.c.h.b16 %v383
        %v873 = vunpack.c.l.b16 %v384
        %v874 = vunpack.c.h.b16 %v384
        %v875 = vunpack.c.l.b16 %v385
        %v876 = vunpack.c.h.b16 %v385
        %v877 = vunpack.c.l.b16 %v386
        %v878 = vunpack.c.h.b16 %v386
        %v879 = vunpack.c.l.b16 %v387
        %v880 = vunpack.c.h.b16 %v387
        %v881 = vunpack.c.l.b16 %v388
        %v882 = vunpack.c.h.b16 %v388
        %v883 = vunpack.c.l.b16 %v389
        %v884 = vunpack.c.h.b16 %v389
        %v885 = vunpack.c.l.b16 %v390
        %v886 = vunpack.c.h.b16 %v390
        %v887 = vunpack.c.l.b16 %v391
        %v888 = vunpack.c.h.b16 %v391
        %v889 = vunpack.c.l.b16 %v392
        %v890 = vunpack.c.h.b16 %v392
        %v891 = vunpack.c.l.b16 %v393
        %v892 = vunpack.c.h.b16 %v393
        %v893 = vunpack.c.l.b16 %v394
        %v894 = vunpack.c.h.b16 %v394
        %v895 = vunpack.c.l.b16 %v395
        %v896 = vunpack.c.h.b16 %v395
        %v897 = vunpack.c.l.b16 %v396
        %v898 = vunpack.c.h.b16 %v396
        %v899 = vunpack.c.l.b16 %v397
        %v900 = vunpack.c.h.b16 %v397
        %v901 = vunpack.c.l.b16 %v398
        %v902 = vunpack.c.h.b16 %v398
        %v903 = vunpack.c.l.b16 %v399
        %v904 = vunpack.c.h.b16 %v399
        %v905 = vunpack.c.l.b16 %v400
        %v906 = vunpack.c.h.b16 %v400
        %v907 = vunpack.c.l.b16 %v401
        %v908 = vunpack.c.h.b16 %v401
        %v909 = vunpack.c.l.b16 %v402
        %v910 = vunpack.c.h.b16 %v402
        %v911 = vunpack.c.l.b16 %v403
        %v912 = vunpack.c.h.b16 %v403
        %v913 = vunpack.c.l.b16 %v404
        %v914 = vunpack.c.h.b16 %v404
        %v915 = vunpack.c.l.b16 %v405
        %v916 = vunpack.c.h.b16 %v405
        %v917 = vunpack.c.l.b16 %v406
        %v918 = vunpack.c.h.b16 %v406
        %v919 = vunpack.c.l.b16 %v407
        %v920 = vunpack.c.h.b16 %v407
        %v921 = vunpack.c.l.b16 %v408
        %v922 = vunpack.c.h.b16 %v408
        %v923 = vunpack.c.l.b16 %v409
        %v924 = vunpack.c.h.b16 %v409
        %v925 = vunpack.c.l.b16 %v410
        %v926 = vunpack.c.h.b16 %v410
        %v927 = vpack.c.b16 %v687, %v671
        %v928 = vpack.c.b16 %v688, %v672
        %v929 = vpack.c.b16 %v689, %v673
        %v930 = vpack.c.b16 %v690, %v674
        %v931 = vpack.c.b16 %v691, %v675
        %v932 = vpack.c.b16 %v692, %v676
        %v933 = vpack.c.b16 %v693, %v677
        %v934 = vpack.c.b16 %v694, %v678
        %v935 = vpack.c.b16 %v695, %v679
        %v936 = vpack.c.b16 %v696, %v680
        %v937 = vpack.c.b16 %v697, %v681
        %v938 = vpack.c.b16 %v698, %v682
        %v939 = vpack.c.b16 %v699, %v683
        %v940 = vpack.c.b16 %v700, %v684
        %v941 = vpack.c.b16 %v701, %v685
        %v942 = vpack.c.b16 %v702, %v686
        %v943 = vpack.c.b16 %v719, %v703
        %v944 = vpack.c.b16 %v720, %v704
        %v945 = vpack.c.b16 %v721, %v705
        %v946 = vpack.c.b16 %v722, %v706
        %v947 = vpack.c.b16 %v723, %v707
        %v948 = vpack.c.b16 %v724, %v708
        %v949 = vpack.c.b16 %v725, %v709
        %v950 = vpack.c.b16 %v726, %v710
        %v951 = vpack.c.b16 %v727, %v711
        %v952 = vpack.c.b16 %v728, %v712
        %v953 = vpack.c.b16 %v729, %v713
        %v954 = vpack.c.b16 %v730, %v714
        %v955 = vpack.c.b16 %v731, %v715
        %v956 = vpack.c.b16 %v732, %v716
        %v957 = vpack.c.b16 %v733, %v717
        %v958 = vpack.c.b16 %v734, %v718
        %v959 = vpack.c.b16 %v751, %v735
        %v960 = vpack.c.b16 %v752, %v736
        %v961 = vpack.c.b16 %v753, %v737
        %v962 = vpack.c.b16 %v754, %v738
        %v963 = vpack.c.b16 %v755, %v739
        %v964 = vpack.c.b16 %v756, %v740
        %v965 = vpack.c.b16 %v757, %v741
        %v966 = vpack.c.b16 %v758, %v742
        %v967 = vpack.c.b16 %v759, %v743
        %v968 = vpack.c.b16 %v760, %v744
        %v969 = vpack.c.b16 %v761, %v745
        %v970 = vpack.c.b16 %v762, %v746
        %v971 = vpack.c.b16 %v763, %v747
        %v972 = vpack.c.b16 %v764, %v748
        %v973 = vpack.c.b16 %v765, %v749
        %v974 = vpack.c.b16 %v766, %v750
        %v975 = vpack.c.b16 %v783, %v767
        %v976 = vpack.c.b16 %v784, %v768
        %v977 = vpack.c.b16 %v785, %v769
        %v978 = vpack.c.b16 %v786, %v770
        %v979 = vpack.c.b16 %v787, %v771
        %v980 = vpack.c.b16 %v788, %v772
        %v981 = vpack.c.b16 %v789, %v773
        %v982 = vpack.c.b16 %v790, %v774
        %v983 = vpack.c.b16 %v791, %v775
        %v984 = vpack.c.b16 %v792, %v776
        %v985 = vpack.c.b16 %v793, %v777
        %v986 = vpack.c.b16 %v794, %v778
        %v987 = vpack.c.b16 %v795, %v779
        %v988 = vpack.c.b16 %v796, %v780
        %v989 = vpack.c.b16 %v797, %v781
        %v990 = vpack.c.b16 %v798, %v782
        %v991 = vpack.c.b16 %v815, %v799
        %v992 = vpack.c.b16 %v816, %v800
        %v993 = vpack.c.b16 %v817, %v801
        %v994 = vpack.c.b16 %v818, %v802
        %v995 = vpack.c.b16 %v819, %v803
        %v996 = vpack.c.b16 %v820, %v804
        %v997 = vpack.c.b16 %v821, %v805
        %v998 = vpack.c.b16 %v822, %v806
        %v999 = vpack.c.b16 %v823, %v807
        %v1000 = vpack.c.b16 %v824, %v808
        %v1001 = vpack.c.b16 %v825, %v809
        %v1002 = vpack.c.b16 %v826, %v810
        %v1003 = vpack.c.b16 %v827, %v811
        %v1004 = vpack.c.b16 %v828, %v812
        %v1005 = vpack.c.b16 %v829, %v813
        %v1006 = vpack.c.b16 %v830, %v814
        %v1007 = vpack.c.b16 %v847, %v831
        %v1008 = vpack.c.b16 %v848, %v832
        %v1009 = vpack.c.b16 %v849, %v833
        %v1010 = vpack.c.b16 %v850, %v834
        %v1011 = vpack.c.b16 %v851, %v835
        %v1012 = vpack.c.b16 %v852, %v836
        %v1013 = vpack.c.b16 %v853, %v837
        %v1014 = vpack.c.b16 %v854, %v838
        %v1015 = vpack.c.b16 %v855, %v839
        %v1016 = vpack.c.b16 %v856, %v840
        %v1017 = vpack.c.b16 %v857, %v841
        %v1018 = vpack.c.b16 %v858, %v842
        %v1019 = vpack.c.b16 %v859, %v843
        %v1020 = vpack.c.b16 %v860, %v844
        %v1021 = vpack.c.b16 %v861, %v845
        %v1022 = vpack.c.b16 %v862, %v846
        %v1023 = vpack.c.b16 %v879, %v863
        %v1024 = vpack.c.b16 %v880, %v864
        %v1025 = vpack.c.b16 %v881, %v865
        %v1026 = vpack.c.b16 %v882, %v866
        %v1027 = vpack.c.b16 %v883, %v867
        %v1028 = vpack.c.b16 %v884, %v868
        %v1029 = vpack.c.b16 %v885, %v869
        %v1030 = vpack.c.b16 %v886, %v870
        %v1031 = vpack.c.b16 %v887, %v871
        %v1032 = vpack.c.b16 %v888, %v872
        %v1033 = vpack.c.b16 %v889, %v873
        %v1034 = vpack.c.b16 %v890, %v874
        %v1035 = vpack.c.b16 %v891, %v875
        %v1036 = vpack.c.b16 %v892, %v876
        %v1037 = vpack.c.b16 %v893, %v877
        %v1038 = vpack.c.b16 %v894, %v878
        %v1039 = vpack.c.b16 %v911, %v895
        %v1040 = vpack.c.b16 %v912, %v896
        %v1041 = vpack.c.b16 %v913, %v897
        %v1042 = vpack.c.b16 %v914, %v898
        %v1043 = vpack.c.b16 %v915, %v899
        %v1044 = vpack.c.b16 %v916, %v900
        %v1045 = vpack.c.b16 %v917, %v901
        %v1046 = vpack.c.b16 %v918, %v902
        %v1047 = vpack.c.b16 %v919, %v903
        %v1048 = vpack.c.b16 %v920, %v904
        %v1049 = vpack.c.b16 %v921, %v905
        %v1050 = vpack.c.b16 %v922, %v906
        %v1051 = vpack.c.b16 %v923, %v907
        %v1052 = vpack.c.b16 %v924, %v908
        %v1053 = vpack.c.b16 %v925, %v909
        %v1054 = vpack.c.b16 %v926, %v910
        %1183 = vmatprep.subr.bf16.mxu0 %v928
        %1184 = vmatpush1.bf16.msra.mxu0 %v927
        %1185 = vmatprep.subr.bf16.mxu0 %v944
        %1186 = vmatpush1.bf16.msra.mxu0 %v943
        %1187 = vmatprep.subr.bf16.mxu0 %v960
        %1188 = vmatpush1.bf16.msra.mxu0 %v959
        %1189 = vmatprep.subr.bf16.mxu0 %v976
        %1190 = vmatpush1.bf16.msra.mxu0 %v975
        %1191 = vmatprep.subr.bf16.mxu0 %v992
        %1192 = vmatpush1.bf16.msra.mxu0 %v991
        %1193 = vmatprep.subr.bf16.mxu0 %v1008
        %1194 = vmatpush1.bf16.msra.mxu0 %v1007
        %1195 = vmatprep.subr.bf16.mxu0 %v1024
        %1196 = vmatpush1.bf16.msra.mxu0 %v1023
        %1197 = vmatprep.subr.bf16.mxu0 %v1040
        %1198 = vmatpush1.bf16.msra.mxu0 %v1039
        %1199 = vmatprep.subr.bf16.mxu0 0
        %1200 = vmatpush1.bf16.msra.mxu0 0
        %1201 = vmatprep.subr.bf16.mxu0 0
        %1202 = vmatpush1.bf16.msra.mxu0 0
        %1203 = vmatprep.subr.bf16.mxu0 0
        %1204 = vmatpush1.bf16.msra.mxu0 0
        %1205 = vmatprep.subr.bf16.mxu0 0
        %1206 = vmatpush1.bf16.msra.mxu0 0
        %1207 = vmatprep.subr.bf16.mxu0 0
        %1208 = vmatpush1.bf16.msra.mxu0 0
        %1209 = vmatprep.subr.bf16.mxu0 0
        %1210 = vmatpush1.bf16.msra.mxu0 0
        %1211 = vmatprep.subr.bf16.mxu0 0
        %1212 = vmatpush1.bf16.msra.mxu0 0
        %1213 = vmatprep.subr.bf16.mxu0 0
        %1214 = vmatpush1.bf16.msra.mxu0 0
        %1215 = vmatprep.mubr.bf16.mxu0 0
        %1216 = vmatmul.mubr.bf16.gmra.mrb[0].mxu0 %v527
        %v1217 = vpop.f32.mrb[0].mxu0
        %v1218 = vadd.f32 %v418, %v1217
        %v1219 = vpop.f32.mrb[0].mxu0
        %v1220 = vadd.f32 %v422, %v1219
        %v1221 = vpop.f32.mrb[0].mxu0
        %v1222 = vadd.f32 %v418, %v1221
        %v1223 = vpop.f32.mrb[0].mxu0
        %v1224 = vadd.f32 %v422, %v1223
        %1225 = vmatprep.mubr.bf16.mxu0 0
        %1226 = vmatmul.mubr.bf16.gmra.mrb[0].mxu0 %v528
        %v1227 = vpop.f32.mrb[0].mxu0
        %v1228 = vadd.f32 %v418, %v1227
        %v1229 = vpop.f32.mrb[0].mxu0
        %v1230 = vadd.f32 %v422, %v1229
        %v1231 = vpop.f32.mrb[0].mxu0
        %v1232 = vadd.f32 %v418, %v1231
        %v1233 = vpop.f32.mrb[0].mxu0
        %v1234 = vadd.f32 %v422, %v1233
        %1235 = vmatprep.mubr.bf16.mxu0 0
        %1236 = vmatmul.mubr.bf16.gmra.mrb[0].mxu0 %v529
        %v1237 = vpop.f32.mrb[0].mxu0
        %v1238 = vadd.f32 %v418, %v1237
        %v1239 = vpop.f32.mrb[0].mxu0
        %v1240 = vadd.f32 %v422, %v1239
        %v1241 = vpop.f32.mrb[0].mxu0
        %v1242 = vadd.f32 %v418, %v1241
        %v1243 = vpop.f32.mrb[0].mxu0
        %v1244 = vadd.f32 %v422, %v1243
        %1245 = vmatprep.mubr.bf16.mxu0 0
        %1246 = vmatmul.mubr.bf16.gmra.mrb[0].mxu0 %v530
        %v1247 = vpop.f32.mrb[0].mxu0
        %v1248 = vadd.f32 %v418, %v1247
        %v1249 = vpop.f32.mrb[0].mxu0
        %v1250 = vadd.f32 %v422, %v1249
        %v1251 = vpop.f32.mrb[0].mxu0
        %v1252 = vadd.f32 %v418, %v1251
        %v1253 = vpop.f32.mrb[0].mxu0
        %v1254 = vadd.f32 %v422, %v1253
        %1255 = vmatprep.mubr.bf16.mxu0 0
        %1256 = vmatmul.mubr.bf16.gmra.mrb[0].mxu0 %v531
        %v1257 = vpop.f32.mrb[0].mxu0
        %v1258 = vadd.f32 %v418, %v1257
        %v1259 = vpop.f32.mrb[0].mxu0
        %v1260 = vadd.f32 %v422, %v1259
        %v1261 = vpop.f32.mrb[0].mxu0
        %v1262 = vadd.f32 %v418, %v1261
        %v1263 = vpop.f32.mrb[0].mxu0
        %v1264 = vadd.f32 %v422, %v1263
        %1265 = vmatprep.mubr.bf16.mxu0 0
        %1266 = vmatmul.mubr.bf16.gmra.mrb[0].mxu0 %v532
        %v1267 = vpop.f32.mrb[0].mxu0
        %v1268 = vadd.f32 %v418, %v1267
        %v1269 = vpop.f32.mrb[0].mxu0
        %v1270 = vadd.f32 %v422, %v1269
        %v1271 = vpop.f32.mrb[0].mxu0
        %v1272 = vadd.f32 %v418, %v1271
        %v1273 = vpop.f32.mrb[0].mxu0
        %v1274 = vadd.f32 %v422, %v1273
        %1275 = vmatprep.mubr.bf16.mxu0 0
        %1276 = vmatmul.mubr.bf16.gmra.mrb[0].mxu0 %v533
        %v1277 = vpop.f32.mrb[0].mxu0
        %v1278 = vadd.f32 %v418, %v1277
        %v1279 = vpop.f32.mrb[0].mxu0
        %v1280 = vadd.f32 %v422, %v1279
        %v1281 = vpop.f32.mrb[0].mxu0
        %v1282 = vadd.f32 %v418, %v1281
        %v1283 = vpop.f32.mrb[0].mxu0
        %v1284 = vadd.f32 %v422, %v1283
        %1285 = vmatprep.mubr.bf16.mxu0 0
        %1286 = vmatmul.mubr.bf16.gmra.mrb[0].mxu0 %v534
        %v1287 = vpop.f32.mrb[0].mxu0
        %v1288 = vadd.f32 %v418, %v1287
        %v1289 = vpop.f32.mrb[0].mxu0
        %v1290 = vadd.f32 %v422, %v1289
        %v1291 = vpop.f32.mrb[0].mxu0
        %v1292 = vadd.f32 %v418, %v1291
        %v1293 = vpop.f32.mrb[0].mxu0
        %v1294 = vadd.f32 %v422, %v1293
        %1295 = vdwg.mxu0
        %1296 = vmatprep.subr.bf16.mxu0 %v930
        %1297 = vmatpush1.bf16.msra.mxu0 %v929
        %1298 = vmatprep.subr.bf16.mxu0 %v946
        %1299 = vmatpush1.bf16.msra.mxu0 %v945
        %1300 = vmatprep.subr.bf16.mxu0 %v962
        %1301 = vmatpush1.bf16.msra.mxu0 %v961
        %1302 = vmatprep.subr.bf16.mxu0 %v978
        %1303 = vmatpush1.bf16.msra.mxu0 %v977
        %1304 = vmatprep.subr.bf16.mxu0 %v994
        %1305 = vmatpush1.bf16.msra.mxu0 %v993
        %1306 = vmatprep.subr.bf16.mxu0 %v1010
        %1307 = vmatpush1.bf16.msra.mxu0 %v1009
        %1308 = vmatprep.subr.bf16.mxu0 %v1026
        %1309 = vmatpush1.bf16.msra.mxu0 %v1025
        %1310 = vmatprep.subr.bf16.mxu0 %v1042
        %1311 = vmatpush1.bf16.msra.mxu0 %v1041
        %1312 = vmatprep.subr.bf16.mxu0 0
        %1313 = vmatpush1.bf16.msra.mxu0 0
        %1314 = vmatprep.subr.bf16.mxu0 0
        %1315 = vmatpush1.bf16.msra.mxu0 0
        %1316 = vmatprep.subr.bf16.mxu0 0
        %1317 = vmatpush1.bf16.msra.mxu0 0
        %1318 = vmatprep.subr.bf16.mxu0 0
        %1319 = vmatpush1.bf16.msra.mxu0 0
        %1320 = vmatprep.subr.bf16.mxu0 0
        %1321 = vmatpush1.bf16.msra.mxu0 0
        %1322 = vmatprep.subr.bf16.mxu0 0
        %1323 = vmatpush1.bf16.msra.mxu0 0
        %1324 = vmatprep.subr.bf16.mxu0 0
        %1325 = vmatpush1.bf16.msra.mxu0 0
        %1326 = vmatprep.subr.bf16.mxu0 0
        %1327 = vmatpush1.bf16.msra.mxu0 0
        %1328 = vmatprep.mubr.bf16.mxu0 0
        %1329 = vmatmul.mubr.bf16.gmra.mrb[0].mxu0 %v527
        %v1330 = vpop.f32.mrb[0].mxu0
        %v1331 = vadd.f32 %v426, %v1330
        %v1332 = vpop.f32.mrb[0].mxu0
        %v1333 = vadd.f32 %v430, %v1332
        %v1334 = vpop.f32.mrb[0].mxu0
        %v1335 = vadd.f32 %v426, %v1334
        %v1336 = vpop.f32.mrb[0].mxu0
        %v1337 = vadd.f32 %v430, %v1336
        %1338 = vmatprep.mubr.bf16.mxu0 0
        %1339 = vmatmul.mubr.bf16.gmra.mrb[0].mxu0 %v528
        %v1340 = vpop.f32.mrb[0].mxu0
        %v1341 = vadd.f32 %v426, %v1340
        %v1342 = vpop.f32.mrb[0].mxu0
        %v1343 = vadd.f32 %v430, %v1342
        %v1344 = vpop.f32.mrb[0].mxu0
        %v1345 = vadd.f32 %v426, %v1344
        %v1346 = vpop.f32.mrb[0].mxu0
        %v1347 = vadd.f32 %v430, %v1346
        %1348 = vmatprep.mubr.bf16.mxu0 0
        %1349 = vmatmul.mubr.bf16.gmra.mrb[0].mxu0 %v529
        %v1350 = vpop.f32.mrb[0].mxu0
        %v1351 = vadd.f32 %v426, %v1350
        %v1352 = vpop.f32.mrb[0].mxu0
        %v1353 = vadd.f32 %v430, %v1352
        %v1354 = vpop.f32.mrb[0].mxu0
        %v1355 = vadd.f32 %v426, %v1354
        %v1356 = vpop.f32.mrb[0].mxu0
        %v1357 = vadd.f32 %v430, %v1356
        %1358 = vmatprep.mubr.bf16.mxu0 0
        %1359 = vmatmul.mubr.bf16.gmra.mrb[0].mxu0 %v530
        %v1360 = vpop.f32.mrb[0].mxu0
        %v1361 = vadd.f32 %v426, %v1360
        %v1362 = vpop.f32.mrb[0].mxu0
        %v1363 = vadd.f32 %v430, %v1362
        %v1364 = vpop.f32.mrb[0].mxu0
        %v1365 = vadd.f32 %v426, %v1364
        %v1366 = vpop.f32.mrb[0].mxu0
        %v1367 = vadd.f32 %v430, %v1366
        %1368 = vmatprep.mubr.bf16.mxu0 0
        %1369 = vmatmul.mubr.bf16.gmra.mrb[0].mxu0 %v531
        %v1370 = vpop.f32.mrb[0].mxu0
        %v1371 = vadd.f32 %v426, %v1370
        %v1372 = vpop.f32.mrb[0].mxu0
        %v1373 = vadd.f32 %v430, %v1372
        %v1374 = vpop.f32.mrb[0].mxu0
        %v1375 = vadd.f32 %v426, %v1374
        %v1376 = vpop.f32.mrb[0].mxu0
        %v1377 = vadd.f32 %v430, %v1376
        %1378 = vmatprep.mubr.bf16.mxu0 0
        %1379 = vmatmul.mubr.bf16.gmra.mrb[0].mxu0 %v532
        %v1380 = vpop.f32.mrb[0].mxu0
        %v1381 = vadd.f32 %v426, %v1380
        %v1382 = vpop.f32.mrb[0].mxu0
        %v1383 = vadd.f32 %v430, %v1382
        %v1384 = vpop.f32.mrb[0].mxu0
        %v1385 = vadd.f32 %v426, %v1384
        %v1386 = vpop.f32.mrb[0].mxu0
        %v1387 = vadd.f32 %v430, %v1386
        %1388 = vmatprep.mubr.bf16.mxu0 0
        %1389 = vmatmul.mubr.bf16.gmra.mrb[0].mxu0 %v533
        %v1390 = vpop.f32.mrb[0].mxu0
        %v1391 = vadd.f32 %v426, %v1390
        %v1392 = vpop.f32.mrb[0].mxu0
        %v1393 = vadd.f32 %v430, %v1392
        %v1394 = vpop.f32.mrb[0].mxu0
        %v1395 = vadd.f32 %v426, %v1394
        %v1396 = vpop.f32.mrb[0].mxu0
        %v1397 = vadd.f32 %v430, %v1396
        %1398 = vmatprep.mubr.bf16.mxu0 0
        %1399 = vmatmul.mubr.bf16.gmra.mrb[0].mxu0 %v534
        %v1400 = vpop.f32.mrb[0].mxu0
        %v1401 = vadd.f32 %v426, %v1400
        %v1402 = vpop.f32.mrb[0].mxu0
        %v1403 = vadd.f32 %v430, %v1402
        %v1404 = vpop.f32.mrb[0].mxu0
        %v1405 = vadd.f32 %v426, %v1404
        %v1406 = vpop.f32.mrb[0].mxu0
        %v1407 = vadd.f32 %v430, %v1406
        %1408 = vdwg.mxu0
        %1409 = vmatprep.subr.bf16.mxu0 %v932
        %1410 = vmatpush1.bf16.msra.mxu0 %v931
        %1411 = vmatprep.subr.bf16.mxu0 %v948
        %1412 = vmatpush1.bf16.msra.mxu0 %v947
        %1413 = vmatprep.subr.bf16.mxu0 %v964
        %1414 = vmatpush1.bf16.msra.mxu0 %v963
        %1415 = vmatprep.subr.bf16.mxu0 %v980
        %1416 = vmatpush1.bf16.msra.mxu0 %v979
        %1417 = vmatprep.subr.bf16.mxu0 %v996
        %1418 = vmatpush1.bf16.msra.mxu0 %v995
        %1419 = vmatprep.subr.bf16.mxu0 %v1012
        %1420 = vmatpush1.bf16.msra.mxu0 %v1011
        %1421 = vmatprep.subr.bf16.mxu0 %v1028
        %1422 = vmatpush1.bf16.msra.mxu0 %v1027
        %1423 = vmatprep.subr.bf16.mxu0 %v1044
        %1424 = vmatpush1.bf16.msra.mxu0 %v1043
        %1425 = vmatprep.subr.bf16.mxu0 0
        %1426 = vmatpush1.bf16.msra.mxu0 0
        %1427 = vmatprep.subr.bf16.mxu0 0
        %1428 = vmatpush1.bf16.msra.mxu0 0
        %1429 = vmatprep.subr.bf16.mxu0 0
        %1430 = vmatpush1.bf16.msra.mxu0 0
        %1431 = vmatprep.subr.bf16.mxu0 0
        %1432 = vmatpush1.bf16.msra.mxu0 0
        %1433 = vmatprep.subr.bf16.mxu0 0
        %1434 = vmatpush1.bf16.msra.mxu0 0
        %1435 = vmatprep.subr.bf16.mxu0 0
        %1436 = vmatpush1.bf16.msra.mxu0 0
        %1437 = vmatprep.subr.bf16.mxu0 0
        %1438 = vmatpush1.bf16.msra.mxu0 0
        %1439 = vmatprep.subr.bf16.mxu0 0
        %1440 = vmatpush1.bf16.msra.mxu0 0
        %1441 = vmatprep.mubr.bf16.mxu0 0
        %1442 = vmatmul.mubr.bf16.gmra.mrb[0].mxu0 %v527
        %v1443 = vpop.f32.mrb[0].mxu0
        %v1444 = vadd.f32 %v434, %v1443
        %v1445 = vpop.f32.mrb[0].mxu0
        %v1446 = vadd.f32 %v438, %v1445
        %v1447 = vpop.f32.mrb[0].mxu0
        %v1448 = vadd.f32 %v434, %v1447
        %v1449 = vpop.f32.mrb[0].mxu0
        %v1450 = vadd.f32 %v438, %v1449
        %1451 = vmatprep.mubr.bf16.mxu0 0
        %1452 = vmatmul.mubr.bf16.gmra.mrb[0].mxu0 %v528
        %v1453 = vpop.f32.mrb[0].mxu0
        %v1454 = vadd.f32 %v434, %v1453
        %v1455 = vpop.f32.mrb[0].mxu0
        %v1456 = vadd.f32 %v438, %v1455
        %v1457 = vpop.f32.mrb[0].mxu0
        %v1458 = vadd.f32 %v434, %v1457
        %v1459 = vpop.f32.mrb[0].mxu0
        %v1460 = vadd.f32 %v438, %v1459
        %1461 = vmatprep.mubr.bf16.mxu0 0
        %1462 = vmatmul.mubr.bf16.gmra.mrb[0].mxu0 %v529
        %v1463 = vpop.f32.mrb[0].mxu0
        %v1464 = vadd.f32 %v434, %v1463
        %v1465 = vpop.f32.mrb[0].mxu0
        %v1466 = vadd.f32 %v438, %v1465
        %v1467 = vpop.f32.mrb[0].mxu0
        %v1468 = vadd.f32 %v434, %v1467
        %v1469 = vpop.f32.mrb[0].mxu0
        %v1470 = vadd.f32 %v438, %v1469
        %1471 = vmatprep.mubr.bf16.mxu0 0
        %1472 = vmatmul.mubr.bf16.gmra.mrb[0].mxu0 %v530
        %v1473 = vpop.f32.mrb[0].mxu0
        %v1474 = vadd.f32 %v434, %v1473
        %v1475 = vpop.f32.mrb[0].mxu0
        %v1476 = vadd.f32 %v438, %v1475
        %v1477 = vpop.f32.mrb[0].mxu0
        %v1478 = vadd.f32 %v434, %v1477
        %v1479 = vpop.f32.mrb[0].mxu0
        %v1480 = vadd.f32 %v438, %v1479
        %1481 = vmatprep.mubr.bf16.mxu0 0
        %1482 = vmatmul.mubr.bf16.gmra.mrb[0].mxu0 %v531
        %v1483 = vpop.f32.mrb[0].mxu0
        %v1484 = vadd.f32 %v434, %v1483
        %v1485 = vpop.f32.mrb[0].mxu0
        %v1486 = vadd.f32 %v438, %v1485
        %v1487 = vpop.f32.mrb[0].mxu0
        %v1488 = vadd.f32 %v434, %v1487
        %v1489 = vpop.f32.mrb[0].mxu0
        %v1490 = vadd.f32 %v438, %v1489
        %1491 = vmatprep.mubr.bf16.mxu0 0
        %1492 = vmatmul.mubr.bf16.gmra.mrb[0].mxu0 %v532
        %v1493 = vpop.f32.mrb[0].mxu0
        %v1494 = vadd.f32 %v434, %v1493
        %v1495 = vpop.f32.mrb[0].mxu0
        %v1496 = vadd.f32 %v438, %v1495
        %v1497 = vpop.f32.mrb[0].mxu0
        %v1498 = vadd.f32 %v434, %v1497
        %v1499 = vpop.f32.mrb[0].mxu0
        %v1500 = vadd.f32 %v438, %v1499
        %1501 = vmatprep.mubr.bf16.mxu0 0
        %1502 = vmatmul.mubr.bf16.gmra.mrb[0].mxu0 %v533
        %v1503 = vpop.f32.mrb[0].mxu0
        %v1504 = vadd.f32 %v434, %v1503
        %v1505 = vpop.f32.mrb[0].mxu0
        %v1506 = vadd.f32 %v438, %v1505
        %v1507 = vpop.f32.mrb[0].mxu0
        %v1508 = vadd.f32 %v434, %v1507
        %v1509 = vpop.f32.mrb[0].mxu0
        %v1510 = vadd.f32 %v438, %v1509
        %1511 = vmatprep.mubr.bf16.mxu0 0
        %1512 = vmatmul.mubr.bf16.gmra.mrb[0].mxu0 %v534
        %v1513 = vpop.f32.mrb[0].mxu0
        %v1514 = vadd.f32 %v434, %v1513
        %v1515 = vpop.f32.mrb[0].mxu0
        %v1516 = vadd.f32 %v438, %v1515
        %v1517 = vpop.f32.mrb[0].mxu0
        %v1518 = vadd.f32 %v434, %v1517
        %v1519 = vpop.f32.mrb[0].mxu0
        %v1520 = vadd.f32 %v438, %v1519
        %1521 = vdwg.mxu0
        %1522 = vmatprep.subr.bf16.mxu0 %v934
        %1523 = vmatpush1.bf16.msra.mxu0 %v933
        %1524 = vmatprep.subr.bf16.mxu0 %v950
        %1525 = vmatpush1.bf16.msra.mxu0 %v949
        %1526 = vmatprep.subr.bf16.mxu0 %v966
        %1527 = vmatpush1.bf16.msra.mxu0 %v965
        %1528 = vmatprep.subr.bf16.mxu0 %v982
        %1529 = vmatpush1.bf16.msra.mxu0 %v981
        %1530 = vmatprep.subr.bf16.mxu0 %v998
        %1531 = vmatpush1.bf16.msra.mxu0 %v997
        %1532 = vmatprep.subr.bf16.mxu0 %v1014
        %1533 = vmatpush1.bf16.msra.mxu0 %v1013
        %1534 = vmatprep.subr.bf16.mxu0 %v1030
        %1535 = vmatpush1.bf16.msra.mxu0 %v1029
        %1536 = vmatprep.subr.bf16.mxu0 %v1046
        %1537 = vmatpush1.bf16.msra.mxu0 %v1045
        %1538 = vmatprep.subr.bf16.mxu0 0
        %1539 = vmatpush1.bf16.msra.mxu0 0
        %1540 = vmatprep.subr.bf16.mxu0 0
        %1541 = vmatpush1.bf16.msra.mxu0 0
        %1542 = vmatprep.subr.bf16.mxu0 0
        %1543 = vmatpush1.bf16.msra.mxu0 0
        %1544 = vmatprep.subr.bf16.mxu0 0
        %1545 = vmatpush1.bf16.msra.mxu0 0
        %1546 = vmatprep.subr.bf16.mxu0 0
        %1547 = vmatpush1.bf16.msra.mxu0 0
        %1548 = vmatprep.subr.bf16.mxu0 0
        %1549 = vmatpush1.bf16.msra.mxu0 0
        %1550 = vmatprep.subr.bf16.mxu0 0
        %1551 = vmatpush1.bf16.msra.mxu0 0
        %1552 = vmatprep.subr.bf16.mxu0 0
        %1553 = vmatpush1.bf16.msra.mxu0 0
        %1554 = vmatprep.mubr.bf16.mxu0 0
        %1555 = vmatmul.mubr.bf16.gmra.mrb[0].mxu0 %v527
        %v1556 = vpop.f32.mrb[0].mxu0
        %v1557 = vadd.f32 %v442, %v1556
        %v1558 = vpop.f32.mrb[0].mxu0
        %v1559 = vadd.f32 %v446, %v1558
        %v1560 = vpop.f32.mrb[0].mxu0
        %v1561 = vadd.f32 %v442, %v1560
        %v1562 = vpop.f32.mrb[0].mxu0
        %v1563 = vadd.f32 %v446, %v1562
        %1564 = vmatprep.mubr.bf16.mxu0 0
        %1565 = vmatmul.mubr.bf16.gmra.mrb[0].mxu0 %v528
        %v1566 = vpop.f32.mrb[0].mxu0
        %v1567 = vadd.f32 %v442, %v1566
        %v1568 = vpop.f32.mrb[0].mxu0
        %v1569 = vadd.f32 %v446, %v1568
        %v1570 = vpop.f32.mrb[0].mxu0
        %v1571 = vadd.f32 %v442, %v1570
        %v1572 = vpop.f32.mrb[0].mxu0
        %v1573 = vadd.f32 %v446, %v1572
        %1574 = vmatprep.mubr.bf16.mxu0 0
        %1575 = vmatmul.mubr.bf16.gmra.mrb[0].mxu0 %v529
        %v1576 = vpop.f32.mrb[0].mxu0
        %v1577 = vadd.f32 %v442, %v1576
        %v1578 = vpop.f32.mrb[0].mxu0
        %v1579 = vadd.f32 %v446, %v1578
        %v1580 = vpop.f32.mrb[0].mxu0
        %v1581 = vadd.f32 %v442, %v1580
        %v1582 = vpop.f32.mrb[0].mxu0
        %v1583 = vadd.f32 %v446, %v1582
        %1584 = vmatprep.mubr.bf16.mxu0 0
        %1585 = vmatmul.mubr.bf16.gmra.mrb[0].mxu0 %v530
        %v1586 = vpop.f32.mrb[0].mxu0
        %v1587 = vadd.f32 %v442, %v1586
        %v1588 = vpop.f32.mrb[0].mxu0
        %v1589 = vadd.f32 %v446, %v1588
        %v1590 = vpop.f32.mrb[0].mxu0
        %v1591 = vadd.f32 %v442, %v1590
        %v1592 = vpop.f32.mrb[0].mxu0
        %v1593 = vadd.f32 %v446, %v1592
        %1594 = vmatprep.mubr.bf16.mxu0 0
        %1595 = vmatmul.mubr.bf16.gmra.mrb[0].mxu0 %v531
        %v1596 = vpop.f32.mrb[0].mxu0
        %v1597 = vadd.f32 %v442, %v1596
        %v1598 = vpop.f32.mrb[0].mxu0
        %v1599 = vadd.f32 %v446, %v1598
        %v1600 = vpop.f32.mrb[0].mxu0
        %v1601 = vadd.f32 %v442, %v1600
        %v1602 = vpop.f32.mrb[0].mxu0
        %v1603 = vadd.f32 %v446, %v1602
        %1604 = vmatprep.mubr.bf16.mxu0 0
        %1605 = vmatmul.mubr.bf16.gmra.mrb[0].mxu0 %v532
        %v1606 = vpop.f32.mrb[0].mxu0
        %v1607 = vadd.f32 %v442, %v1606
        %v1608 = vpop.f32.mrb[0].mxu0
        %v1609 = vadd.f32 %v446, %v1608
        %v1610 = vpop.f32.mrb[0].mxu0
        %v1611 = vadd.f32 %v442, %v1610
        %v1612 = vpop.f32.mrb[0].mxu0
        %v1613 = vadd.f32 %v446, %v1612
        %1614 = vmatprep.mubr.bf16.mxu0 0
        %1615 = vmatmul.mubr.bf16.gmra.mrb[0].mxu0 %v533
        %v1616 = vpop.f32.mrb[0].mxu0
        %v1617 = vadd.f32 %v442, %v1616
        %v1618 = vpop.f32.mrb[0].mxu0
        %v1619 = vadd.f32 %v446, %v1618
        %v1620 = vpop.f32.mrb[0].mxu0
        %v1621 = vadd.f32 %v442, %v1620
        %v1622 = vpop.f32.mrb[0].mxu0
        %v1623 = vadd.f32 %v446, %v1622
        %1624 = vmatprep.mubr.bf16.mxu0 0
        %1625 = vmatmul.mubr.bf16.gmra.mrb[0].mxu0 %v534
        %v1626 = vpop.f32.mrb[0].mxu0
        %v1627 = vadd.f32 %v442, %v1626
        %v1628 = vpop.f32.mrb[0].mxu0
        %v1629 = vadd.f32 %v446, %v1628
        %v1630 = vpop.f32.mrb[0].mxu0
        %v1631 = vadd.f32 %v442, %v1630
        %v1632 = vpop.f32.mrb[0].mxu0
        %v1633 = vadd.f32 %v446, %v1632
        %1634 = vdwg.mxu0
        %1635 = vmatprep.subr.bf16.mxu0 %v936
        %1636 = vmatpush1.bf16.msra.mxu0 %v935
        %1637 = vmatprep.subr.bf16.mxu0 %v952
        %1638 = vmatpush1.bf16.msra.mxu0 %v951
        %1639 = vmatprep.subr.bf16.mxu0 %v968
        %1640 = vmatpush1.bf16.msra.mxu0 %v967
        %1641 = vmatprep.subr.bf16.mxu0 %v984
        %1642 = vmatpush1.bf16.msra.mxu0 %v983
        %1643 = vmatprep.subr.bf16.mxu0 %v1000
        %1644 = vmatpush1.bf16.msra.mxu0 %v999
        %1645 = vmatprep.subr.bf16.mxu0 %v1016
        %1646 = vmatpush1.bf16.msra.mxu0 %v1015
        %1647 = vmatprep.subr.bf16.mxu0 %v1032
        %1648 = vmatpush1.bf16.msra.mxu0 %v1031
        %1649 = vmatprep.subr.bf16.mxu0 %v1048
        %1650 = vmatpush1.bf16.msra.mxu0 %v1047
        %1651 = vmatprep.subr.bf16.mxu0 0
        %1652 = vmatpush1.bf16.msra.mxu0 0
        %1653 = vmatprep.subr.bf16.mxu0 0
        %1654 = vmatpush1.bf16.msra.mxu0 0
        %1655 = vmatprep.subr.bf16.mxu0 0
        %1656 = vmatpush1.bf16.msra.mxu0 0
        %1657 = vmatprep.subr.bf16.mxu0 0
        %1658 = vmatpush1.bf16.msra.mxu0 0
        %1659 = vmatprep.subr.bf16.mxu0 0
        %1660 = vmatpush1.bf16.msra.mxu0 0
        %1661 = vmatprep.subr.bf16.mxu0 0
        %1662 = vmatpush1.bf16.msra.mxu0 0
        %1663 = vmatprep.subr.bf16.mxu0 0
        %1664 = vmatpush1.bf16.msra.mxu0 0
        %1665 = vmatprep.subr.bf16.mxu0 0
        %1666 = vmatpush1.bf16.msra.mxu0 0
        %1667 = vmatprep.mubr.bf16.mxu0 0
        %1668 = vmatmul.mubr.bf16.gmra.mrb[0].mxu0 %v527
        %v1669 = vpop.f32.mrb[0].mxu0
        %v1670 = vadd.f32 %v450, %v1669
        %v1671 = vpop.f32.mrb[0].mxu0
        %v1672 = vadd.f32 %v454, %v1671
        %v1673 = vpop.f32.mrb[0].mxu0
        %v1674 = vadd.f32 %v450, %v1673
        %v1675 = vpop.f32.mrb[0].mxu0
        %v1676 = vadd.f32 %v454, %v1675
        %1677 = vmatprep.mubr.bf16.mxu0 0
        %1678 = vmatmul.mubr.bf16.gmra.mrb[0].mxu0 %v528
        %v1679 = vpop.f32.mrb[0].mxu0
        %v1680 = vadd.f32 %v450, %v1679
        %v1681 = vpop.f32.mrb[0].mxu0
        %v1682 = vadd.f32 %v454, %v1681
        %v1683 = vpop.f32.mrb[0].mxu0
        %v1684 = vadd.f32 %v450, %v1683
        %v1685 = vpop.f32.mrb[0].mxu0
        %v1686 = vadd.f32 %v454, %v1685
        %1687 = vmatprep.mubr.bf16.mxu0 0
        %1688 = vmatmul.mubr.bf16.gmra.mrb[0].mxu0 %v529
        %v1689 = vpop.f32.mrb[0].mxu0
        %v1690 = vadd.f32 %v450, %v1689
        %v1691 = vpop.f32.mrb[0].mxu0
        %v1692 = vadd.f32 %v454, %v1691
        %v1693 = vpop.f32.mrb[0].mxu0
        %v1694 = vadd.f32 %v450, %v1693
        %v1695 = vpop.f32.mrb[0].mxu0
        %v1696 = vadd.f32 %v454, %v1695
        %1697 = vmatprep.mubr.bf16.mxu0 0
        %1698 = vmatmul.mubr.bf16.gmra.mrb[0].mxu0 %v530
        %v1699 = vpop.f32.mrb[0].mxu0
        %v1700 = vadd.f32 %v450, %v1699
        %v1701 = vpop.f32.mrb[0].mxu0
        %v1702 = vadd.f32 %v454, %v1701
        %v1703 = vpop.f32.mrb[0].mxu0
        %v1704 = vadd.f32 %v450, %v1703
        %v1705 = vpop.f32.mrb[0].mxu0
        %v1706 = vadd.f32 %v454, %v1705
        %1707 = vmatprep.mubr.bf16.mxu0 0
        %1708 = vmatmul.mubr.bf16.gmra.mrb[0].mxu0 %v531
        %v1709 = vpop.f32.mrb[0].mxu0
        %v1710 = vadd.f32 %v450, %v1709
        %v1711 = vpop.f32.mrb[0].mxu0
        %v1712 = vadd.f32 %v454, %v1711
        %v1713 = vpop.f32.mrb[0].mxu0
        %v1714 = vadd.f32 %v450, %v1713
        %v1715 = vpop.f32.mrb[0].mxu0
        %v1716 = vadd.f32 %v454, %v1715
        %1717 = vmatprep.mubr.bf16.mxu0 0
        %1718 = vmatmul.mubr.bf16.gmra.mrb[0].mxu0 %v532
        %v1719 = vpop.f32.mrb[0].mxu0
        %v1720 = vadd.f32 %v450, %v1719
        %v1721 = vpop.f32.mrb[0].mxu0
        %v1722 = vadd.f32 %v454, %v1721
        %v1723 = vpop.f32.mrb[0].mxu0
        %v1724 = vadd.f32 %v450, %v1723
        %v1725 = vpop.f32.mrb[0].mxu0
        %v1726 = vadd.f32 %v454, %v1725
        %1727 = vmatprep.mubr.bf16.mxu0 0
        %1728 = vmatmul.mubr.bf16.gmra.mrb[0].mxu0 %v533
        %v1729 = vpop.f32.mrb[0].mxu0
        %v1730 = vadd.f32 %v450, %v1729
        %v1731 = vpop.f32.mrb[0].mxu0
        %v1732 = vadd.f32 %v454, %v1731
        %v1733 = vpop.f32.mrb[0].mxu0
        %v1734 = vadd.f32 %v450, %v1733
        %v1735 = vpop.f32.mrb[0].mxu0
        %v1736 = vadd.f32 %v454, %v1735
        %1737 = vmatprep.mubr.bf16.mxu0 0
        %1738 = vmatmul.mubr.bf16.gmra.mrb[0].mxu0 %v534
        %v1739 = vpop.f32.mrb[0].mxu0
        %v1740 = vadd.f32 %v450, %v1739
        %v1741 = vpop.f32.mrb[0].mxu0
        %v1742 = vadd.f32 %v454, %v1741
        %v1743 = vpop.f32.mrb[0].mxu0
        %v1744 = vadd.f32 %v450, %v1743
        %v1745 = vpop.f32.mrb[0].mxu0
        %v1746 = vadd.f32 %v454, %v1745
        %1747 = vdwg.mxu0
        %1748 = vmatprep.subr.bf16.mxu0 %v938
        %1749 = vmatpush1.bf16.msra.mxu0 %v937
        %1750 = vmatprep.subr.bf16.mxu0 %v954
        %1751 = vmatpush1.bf16.msra.mxu0 %v953
        %1752 = vmatprep.subr.bf16.mxu0 %v970
        %1753 = vmatpush1.bf16.msra.mxu0 %v969
        %1754 = vmatprep.subr.bf16.mxu0 %v986
        %1755 = vmatpush1.bf16.msra.mxu0 %v985
        %1756 = vmatprep.subr.bf16.mxu0 %v1002
        %1757 = vmatpush1.bf16.msra.mxu0 %v1001
        %1758 = vmatprep.subr.bf16.mxu0 %v1018
        %1759 = vmatpush1.bf16.msra.mxu0 %v1017
        %1760 = vmatprep.subr.bf16.mxu0 %v1034
        %1761 = vmatpush1.bf16.msra.mxu0 %v1033
        %1762 = vmatprep.subr.bf16.mxu0 %v1050
        %1763 = vmatpush1.bf16.msra.mxu0 %v1049
        %1764 = vmatprep.subr.bf16.mxu0 0
        %1765 = vmatpush1.bf16.msra.mxu0 0
        %1766 = vmatprep.subr.bf16.mxu0 0
        %1767 = vmatpush1.bf16.msra.mxu0 0
        %1768 = vmatprep.subr.bf16.mxu0 0
        %1769 = vmatpush1.bf16.msra.mxu0 0
        %1770 = vmatprep.subr.bf16.mxu0 0
        %1771 = vmatpush1.bf16.msra.mxu0 0
        %1772 = vmatprep.subr.bf16.mxu0 0
        %1773 = vmatpush1.bf16.msra.mxu0 0
        %1774 = vmatprep.subr.bf16.mxu0 0
        %1775 = vmatpush1.bf16.msra.mxu0 0
        %1776 = vmatprep.subr.bf16.mxu0 0
        %1777 = vmatpush1.bf16.msra.mxu0 0
        %1778 = vmatprep.subr.bf16.mxu0 0
        %1779 = vmatpush1.bf16.msra.mxu0 0
        %1780 = vmatprep.mubr.bf16.mxu0 0
        %1781 = vmatmul.mubr.bf16.gmra.mrb[0].mxu0 %v527
        %v1782 = vpop.f32.mrb[0].mxu0
        %v1783 = vadd.f32 %v458, %v1782
        %v1784 = vpop.f32.mrb[0].mxu0
        %v1785 = vadd.f32 %v462, %v1784
        %v1786 = vpop.f32.mrb[0].mxu0
        %v1787 = vadd.f32 %v458, %v1786
        %v1788 = vpop.f32.mrb[0].mxu0
        %v1789 = vadd.f32 %v462, %v1788
        %1790 = vmatprep.mubr.bf16.mxu0 0
        %1791 = vmatmul.mubr.bf16.gmra.mrb[0].mxu0 %v528
        %v1792 = vpop.f32.mrb[0].mxu0
        %v1793 = vadd.f32 %v458, %v1792
        %v1794 = vpop.f32.mrb[0].mxu0
        %v1795 = vadd.f32 %v462, %v1794
        %v1796 = vpop.f32.mrb[0].mxu0
        %v1797 = vadd.f32 %v458, %v1796
        %v1798 = vpop.f32.mrb[0].mxu0
        %v1799 = vadd.f32 %v462, %v1798
        %1800 = vmatprep.mubr.bf16.mxu0 0
        %1801 = vmatmul.mubr.bf16.gmra.mrb[0].mxu0 %v529
        %v1802 = vpop.f32.mrb[0].mxu0
        %v1803 = vadd.f32 %v458, %v1802
        %v1804 = vpop.f32.mrb[0].mxu0
        %v1805 = vadd.f32 %v462, %v1804
        %v1806 = vpop.f32.mrb[0].mxu0
        %v1807 = vadd.f32 %v458, %v1806
        %v1808 = vpop.f32.mrb[0].mxu0
        %v1809 = vadd.f32 %v462, %v1808
        %1810 = vmatprep.mubr.bf16.mxu0 0
        %1811 = vmatmul.mubr.bf16.gmra.mrb[0].mxu0 %v530
        %v1812 = vpop.f32.mrb[0].mxu0
        %v1813 = vadd.f32 %v458, %v1812
        %v1814 = vpop.f32.mrb[0].mxu0
        %v1815 = vadd.f32 %v462, %v1814
        %v1816 = vpop.f32.mrb[0].mxu0
        %v1817 = vadd.f32 %v458, %v1816
        %v1818 = vpop.f32.mrb[0].mxu0
        %v1819 = vadd.f32 %v462, %v1818
        %1820 = vmatprep.mubr.bf16.mxu0 0
        %1821 = vmatmul.mubr.bf16.gmra.mrb[0].mxu0 %v531
        %v1822 = vpop.f32.mrb[0].mxu0
        %v1823 = vadd.f32 %v458, %v1822
        %v1824 = vpop.f32.mrb[0].mxu0
        %v1825 = vadd.f32 %v462, %v1824
        %v1826 = vpop.f32.mrb[0].mxu0
        %v1827 = vadd.f32 %v458, %v1826
        %v1828 = vpop.f32.mrb[0].mxu0
        %v1829 = vadd.f32 %v462, %v1828
        %1830 = vmatprep.mubr.bf16.mxu0 0
        %1831 = vmatmul.mubr.bf16.gmra.mrb[0].mxu0 %v532
        %v1832 = vpop.f32.mrb[0].mxu0
        %v1833 = vadd.f32 %v458, %v1832
        %v1834 = vpop.f32.mrb[0].mxu0
        %v1835 = vadd.f32 %v462, %v1834
        %v1836 = vpop.f32.mrb[0].mxu0
        %v1837 = vadd.f32 %v458, %v1836
        %v1838 = vpop.f32.mrb[0].mxu0
        %v1839 = vadd.f32 %v462, %v1838
        %1840 = vmatprep.mubr.bf16.mxu0 0
        %1841 = vmatmul.mubr.bf16.gmra.mrb[0].mxu0 %v533
        %v1842 = vpop.f32.mrb[0].mxu0
        %v1843 = vadd.f32 %v458, %v1842
        %v1844 = vpop.f32.mrb[0].mxu0
        %v1845 = vadd.f32 %v462, %v1844
        %v1846 = vpop.f32.mrb[0].mxu0
        %v1847 = vadd.f32 %v458, %v1846
        %v1848 = vpop.f32.mrb[0].mxu0
        %v1849 = vadd.f32 %v462, %v1848
        %1850 = vmatprep.mubr.bf16.mxu0 0
        %1851 = vmatmul.mubr.bf16.gmra.mrb[0].mxu0 %v534
        %v1852 = vpop.f32.mrb[0].mxu0
        %v1853 = vadd.f32 %v458, %v1852
        %v1854 = vpop.f32.mrb[0].mxu0
        %v1855 = vadd.f32 %v462, %v1854
        %v1856 = vpop.f32.mrb[0].mxu0
        %v1857 = vadd.f32 %v458, %v1856
        %v1858 = vpop.f32.mrb[0].mxu0
        %v1859 = vadd.f32 %v462, %v1858
        %1860 = vdwg.mxu0
        %1861 = vmatprep.subr.bf16.mxu0 %v940
        %1862 = vmatpush1.bf16.msra.mxu0 %v939
        %1863 = vmatprep.subr.bf16.mxu0 %v956
        %1864 = vmatpush1.bf16.msra.mxu0 %v955
        %1865 = vmatprep.subr.bf16.mxu0 %v972
        %1866 = vmatpush1.bf16.msra.mxu0 %v971
        %1867 = vmatprep.subr.bf16.mxu0 %v988
        %1868 = vmatpush1.bf16.msra.mxu0 %v987
        %1869 = vmatprep.subr.bf16.mxu0 %v1004
        %1870 = vmatpush1.bf16.msra.mxu0 %v1003
        %1871 = vmatprep.subr.bf16.mxu0 %v1020
        %1872 = vmatpush1.bf16.msra.mxu0 %v1019
        %1873 = vmatprep.subr.bf16.mxu0 %v1036
        %1874 = vmatpush1.bf16.msra.mxu0 %v1035
        %1875 = vmatprep.subr.bf16.mxu0 %v1052
        %1876 = vmatpush1.bf16.msra.mxu0 %v1051
        %1877 = vmatprep.subr.bf16.mxu0 0
        %1878 = vmatpush1.bf16.msra.mxu0 0
        %1879 = vmatprep.subr.bf16.mxu0 0
        %1880 = vmatpush1.bf16.msra.mxu0 0
        %1881 = vmatprep.subr.bf16.mxu0 0
        %1882 = vmatpush1.bf16.msra.mxu0 0
        %1883 = vmatprep.subr.bf16.mxu0 0
        %1884 = vmatpush1.bf16.msra.mxu0 0
        %1885 = vmatprep.subr.bf16.mxu0 0
        %1886 = vmatpush1.bf16.msra.mxu0 0
        %1887 = vmatprep.subr.bf16.mxu0 0
        %1888 = vmatpush1.bf16.msra.mxu0 0
        %1889 = vmatprep.subr.bf16.mxu0 0
        %1890 = vmatpush1.bf16.msra.mxu0 0
        %1891 = vmatprep.subr.bf16.mxu0 0
        %1892 = vmatpush1.bf16.msra.mxu0 0
        %1893 = vmatprep.mubr.bf16.mxu0 0
        %1894 = vmatmul.mubr.bf16.gmra.mrb[0].mxu0 %v527
        %v1895 = vpop.f32.mrb[0].mxu0
        %v1896 = vadd.f32 %v466, %v1895
        %v1897 = vpop.f32.mrb[0].mxu0
        %v1898 = vadd.f32 %v470, %v1897
        %v1899 = vpop.f32.mrb[0].mxu0
        %v1900 = vadd.f32 %v466, %v1899
        %v1901 = vpop.f32.mrb[0].mxu0
        %v1902 = vadd.f32 %v470, %v1901
        %1903 = vmatprep.mubr.bf16.mxu0 0
        %1904 = vmatmul.mubr.bf16.gmra.mrb[0].mxu0 %v528
        %v1905 = vpop.f32.mrb[0].mxu0
        %v1906 = vadd.f32 %v466, %v1905
        %v1907 = vpop.f32.mrb[0].mxu0
        %v1908 = vadd.f32 %v470, %v1907
        %v1909 = vpop.f32.mrb[0].mxu0
        %v1910 = vadd.f32 %v466, %v1909
        %v1911 = vpop.f32.mrb[0].mxu0
        %v1912 = vadd.f32 %v470, %v1911
        %1913 = vmatprep.mubr.bf16.mxu0 0
        %1914 = vmatmul.mubr.bf16.gmra.mrb[0].mxu0 %v529
        %v1915 = vpop.f32.mrb[0].mxu0
        %v1916 = vadd.f32 %v466, %v1915
        %v1917 = vpop.f32.mrb[0].mxu0
        %v1918 = vadd.f32 %v470, %v1917
        %v1919 = vpop.f32.mrb[0].mxu0
        %v1920 = vadd.f32 %v466, %v1919
        %v1921 = vpop.f32.mrb[0].mxu0
        %v1922 = vadd.f32 %v470, %v1921
        %1923 = vmatprep.mubr.bf16.mxu0 0
        %1924 = vmatmul.mubr.bf16.gmra.mrb[0].mxu0 %v530
        %v1925 = vpop.f32.mrb[0].mxu0
        %v1926 = vadd.f32 %v466, %v1925
        %v1927 = vpop.f32.mrb[0].mxu0
        %v1928 = vadd.f32 %v470, %v1927
        %v1929 = vpop.f32.mrb[0].mxu0
        %v1930 = vadd.f32 %v466, %v1929
        %v1931 = vpop.f32.mrb[0].mxu0
        %v1932 = vadd.f32 %v470, %v1931
        %1933 = vmatprep.mubr.bf16.mxu0 0
        %1934 = vmatmul.mubr.bf16.gmra.mrb[0].mxu0 %v531
        %v1935 = vpop.f32.mrb[0].mxu0
        %v1936 = vadd.f32 %v466, %v1935
        %v1937 = vpop.f32.mrb[0].mxu0
        %v1938 = vadd.f32 %v470, %v1937
        %v1939 = vpop.f32.mrb[0].mxu0
        %v1940 = vadd.f32 %v466, %v1939
        %v1941 = vpop.f32.mrb[0].mxu0
        %v1942 = vadd.f32 %v470, %v1941
        %1943 = vmatprep.mubr.bf16.mxu0 0
        %1944 = vmatmul.mubr.bf16.gmra.mrb[0].mxu0 %v532
        %v1945 = vpop.f32.mrb[0].mxu0
        %v1946 = vadd.f32 %v466, %v1945
        %v1947 = vpop.f32.mrb[0].mxu0
        %v1948 = vadd.f32 %v470, %v1947
        %v1949 = vpop.f32.mrb[0].mxu0
        %v1950 = vadd.f32 %v466, %v1949
        %v1951 = vpop.f32.mrb[0].mxu0
        %v1952 = vadd.f32 %v470, %v1951
        %1953 = vmatprep.mubr.bf16.mxu0 0
        %1954 = vmatmul.mubr.bf16.gmra.mrb[0].mxu0 %v533
        %v1955 = vpop.f32.mrb[0].mxu0
        %v1956 = vadd.f32 %v466, %v1955
        %v1957 = vpop.f32.mrb[0].mxu0
        %v1958 = vadd.f32 %v470, %v1957
        %v1959 = vpop.f32.mrb[0].mxu0
        %v1960 = vadd.f32 %v466, %v1959
        %v1961 = vpop.f32.mrb[0].mxu0
        %v1962 = vadd.f32 %v470, %v1961
        %1963 = vmatprep.mubr.bf16.mxu0 0
        %1964 = vmatmul.mubr.bf16.gmra.mrb[0].mxu0 %v534
        %v1965 = vpop.f32.mrb[0].mxu0
        %v1966 = vadd.f32 %v466, %v1965
        %v1967 = vpop.f32.mrb[0].mxu0
        %v1968 = vadd.f32 %v470, %v1967
        %v1969 = vpop.f32.mrb[0].mxu0
        %v1970 = vadd.f32 %v466, %v1969
        %v1971 = vpop.f32.mrb[0].mxu0
        %v1972 = vadd.f32 %v470, %v1971
        %1973 = vdwg.mxu0
        %1974 = vmatprep.subr.bf16.mxu0 %v942
        %1975 = vmatpush1.bf16.msra.mxu0 %v941
        %1976 = vmatprep.subr.bf16.mxu0 %v958
        %1977 = vmatpush1.bf16.msra.mxu0 %v957
        %1978 = vmatprep.subr.bf16.mxu0 %v974
        %1979 = vmatpush1.bf16.msra.mxu0 %v973
        %1980 = vmatprep.subr.bf16.mxu0 %v990
        %1981 = vmatpush1.bf16.msra.mxu0 %v989
        %1982 = vmatprep.subr.bf16.mxu0 %v1006
        %1983 = vmatpush1.bf16.msra.mxu0 %v1005
        %1984 = vmatprep.subr.bf16.mxu0 %v1022
        %1985 = vmatpush1.bf16.msra.mxu0 %v1021
        %1986 = vmatprep.subr.bf16.mxu0 %v1038
        %1987 = vmatpush1.bf16.msra.mxu0 %v1037
        %1988 = vmatprep.subr.bf16.mxu0 %v1054
        %1989 = vmatpush1.bf16.msra.mxu0 %v1053
        %1990 = vmatprep.subr.bf16.mxu0 0
        %1991 = vmatpush1.bf16.msra.mxu0 0
        %1992 = vmatprep.subr.bf16.mxu0 0
        %1993 = vmatpush1.bf16.msra.mxu0 0
        %1994 = vmatprep.subr.bf16.mxu0 0
        %1995 = vmatpush1.bf16.msra.mxu0 0
        %1996 = vmatprep.subr.bf16.mxu0 0
        %1997 = vmatpush1.bf16.msra.mxu0 0
        %1998 = vmatprep.subr.bf16.mxu0 0
        %1999 = vmatpush1.bf16.msra.mxu0 0
        %2000 = vmatprep.subr.bf16.mxu0 0
        %2001 = vmatpush1.bf16.msra.mxu0 0
        %2002 = vmatprep.subr.bf16.mxu0 0
        %2003 = vmatpush1.bf16.msra.mxu0 0
        %2004 = vmatprep.subr.bf16.mxu0 0
        %2005 = vmatpush1.bf16.msra.mxu0 0
        %2006 = vmatprep.mubr.bf16.mxu0 0
        %2007 = vmatmul.mubr.bf16.gmra.mrb[0].mxu0 %v527
        %v2008 = vpop.f32.mrb[0].mxu0
        %v2009 = vadd.f32 %v474, %v2008
        %v2010 = vpop.f32.mrb[0].mxu0
        %v2011 = vadd.f32 %v478, %v2010
        %v2012 = vpop.f32.mrb[0].mxu0
        %v2013 = vadd.f32 %v474, %v2012
        %v2014 = vpop.f32.mrb[0].mxu0
        %v2015 = vadd.f32 %v478, %v2014
        %2016 = vmatprep.mubr.bf16.mxu0 0
        %2017 = vmatmul.mubr.bf16.gmra.mrb[0].mxu0 %v528
        %v2018 = vpop.f32.mrb[0].mxu0
        %v2019 = vadd.f32 %v474, %v2018
        %v2020 = vpop.f32.mrb[0].mxu0
        %v2021 = vadd.f32 %v478, %v2020
        %v2022 = vpop.f32.mrb[0].mxu0
        %v2023 = vadd.f32 %v474, %v2022
        %v2024 = vpop.f32.mrb[0].mxu0
        %v2025 = vadd.f32 %v478, %v2024
        %2026 = vmatprep.mubr.bf16.mxu0 0
        %2027 = vmatmul.mubr.bf16.gmra.mrb[0].mxu0 %v529
        %v2028 = vpop.f32.mrb[0].mxu0
        %v2029 = vadd.f32 %v474, %v2028
        %v2030 = vpop.f32.mrb[0].mxu0
        %v2031 = vadd.f32 %v478, %v2030
        %v2032 = vpop.f32.mrb[0].mxu0
        %v2033 = vadd.f32 %v474, %v2032
        %v2034 = vpop.f32.mrb[0].mxu0
        %v2035 = vadd.f32 %v478, %v2034
        %2036 = vmatprep.mubr.bf16.mxu0 0
        %2037 = vmatmul.mubr.bf16.gmra.mrb[0].mxu0 %v530
        %v2038 = vpop.f32.mrb[0].mxu0
        %v2039 = vadd.f32 %v474, %v2038
        %v2040 = vpop.f32.mrb[0].mxu0
        %v2041 = vadd.f32 %v478, %v2040
        %v2042 = vpop.f32.mrb[0].mxu0
        %v2043 = vadd.f32 %v474, %v2042
        %v2044 = vpop.f32.mrb[0].mxu0
        %v2045 = vadd.f32 %v478, %v2044
        %2046 = vmatprep.mubr.bf16.mxu0 0
        %2047 = vmatmul.mubr.bf16.gmra.mrb[0].mxu0 %v531
        %v2048 = vpop.f32.mrb[0].mxu0
        %v2049 = vadd.f32 %v474, %v2048
        %v2050 = vpop.f32.mrb[0].mxu0
        %v2051 = vadd.f32 %v478, %v2050
        %v2052 = vpop.f32.mrb[0].mxu0
        %v2053 = vadd.f32 %v474, %v2052
        %v2054 = vpop.f32.mrb[0].mxu0
        %v2055 = vadd.f32 %v478, %v2054
        %2056 = vmatprep.mubr.bf16.mxu0 0
        %2057 = vmatmul.mubr.bf16.gmra.mrb[0].mxu0 %v532
        %v2058 = vpop.f32.mrb[0].mxu0
        %v2059 = vadd.f32 %v474, %v2058
        %v2060 = vpop.f32.mrb[0].mxu0
        %v2061 = vadd.f32 %v478, %v2060
        %v2062 = vpop.f32.mrb[0].mxu0
        %v2063 = vadd.f32 %v474, %v2062
        %v2064 = vpop.f32.mrb[0].mxu0
        %v2065 = vadd.f32 %v478, %v2064
        %2066 = vmatprep.mubr.bf16.mxu0 0
        %2067 = vmatmul.mubr.bf16.gmra.mrb[0].mxu0 %v533
        %v2068 = vpop.f32.mrb[0].mxu0
        %v2069 = vadd.f32 %v474, %v2068
        %v2070 = vpop.f32.mrb[0].mxu0
        %v2071 = vadd.f32 %v478, %v2070
        %v2072 = vpop.f32.mrb[0].mxu0
        %v2073 = vadd.f32 %v474, %v2072
        %v2074 = vpop.f32.mrb[0].mxu0
        %v2075 = vadd.f32 %v478, %v2074
        %2076 = vmatprep.mubr.bf16.mxu0 0
        %2077 = vmatmul.mubr.bf16.gmra.mrb[0].mxu0 %v534
        %v2078 = vpop.f32.mrb[0].mxu0
        %v2079 = vadd.f32 %v474, %v2078
        %v2080 = vpop.f32.mrb[0].mxu0
        %v2081 = vadd.f32 %v478, %v2080
        %v2082 = vpop.f32.mrb[0].mxu0
        %v2083 = vadd.f32 %v474, %v2082
        %v2084 = vpop.f32.mrb[0].mxu0
        %v2085 = vadd.f32 %v478, %v2084
        %2086 = vdwg.mxu0
        %2087 = vst [vmem:[%s260] sm:$0xff] %v1218
        %2088 = vst [vmem:[%s260 + $0x8] sm:$0xff] %v1220
        %2089 = vst [vmem:[%s260 + $0x10] sm:$0xff] %v1331
        %2090 = vst [vmem:[%s260 + $0x18] sm:$0xff] %v1333
        %2091 = vst [vmem:[%s260 + $0x20] sm:$0xff] %v1444
        %2092 = vst [vmem:[%s260 + $0x28] sm:$0xff] %v1446
        %2093 = vst [vmem:[%s260 + $0x30] sm:$0xff] %v1557
        %2094 = vst [vmem:[%s260 + $0x38] sm:$0xff] %v1559
        %2095 = vst [vmem:[%s260 + $0x40] sm:$0xff] %v1670
        %2096 = vst [vmem:[%s260 + $0x48] sm:$0xff] %v1672
        %2097 = vst [vmem:[%s260 + $0x50] sm:$0xff] %v1783
        %2098 = vst [vmem:[%s260 + $0x58] sm:$0xff] %v1785
        %2099 = vst [vmem:[%s260 + $0x60] sm:$0xff] %v1896
        %2100 = vst [vmem:[%s260 + $0x68] sm:$0xff] %v1898
        %2101 = vst [vmem:[%s260 + $0x70] sm:$0xff] %v2009
        %2102 = vst [vmem:[%s260 + $0x78] sm:$0xff] %v2011
        %2103 = vst [vmem:[%s260 + $0x80] sm:$0xff] %v1222
        %2104 = vst [vmem:[%s260 + $0x88] sm:$0xff] %v1224
        %2105 = vst [vmem:[%s260 + $0x90] sm:$0xff] %v1335
        %2106 = vst [vmem:[%s260 + $0x98] sm:$0xff] %v1337
        %2107 = vst [vmem:[%s260 + $0xa0] sm:$0xff] %v1448
        %2108 = vst [vmem:[%s260 + $0xa8] sm:$0xff] %v1450
        %2109 = vst [vmem:[%s260 + $0xb0] sm:$0xff] %v1561
        %2110 = vst [vmem:[%s260 + $0xb8] sm:$0xff] %v1563
        %2111 = vst [vmem:[%s260 + $0xc0] sm:$0xff] %v1674
        %2112 = vst [vmem:[%s260 + $0xc8] sm:$0xff] %v1676
        %2113 = vst [vmem:[%s260 + $0xd0] sm:$0xff] %v1787
        %2114 = vst [vmem:[%s260 + $0xd8] sm:$0xff] %v1789
        %2115 = vst [vmem:[%s260 + $0xe0] sm:$0xff] %v1900
        %2116 = vst [vmem:[%s260 + $0xe8] sm:$0xff] %v1902
        %2117 = vst [vmem:[%s260 + $0xf0] sm:$0xff] %v2013
        %2118 = vst [vmem:[%s260 + $0xf8] sm:$0xff] %v2015
        %2119 = vst [vmem:[%s260 + $0x100] sm:$0xff] %v1228
        %2120 = vst [vmem:[%s260 + $0x108] sm:$0xff] %v1230
        %2121 = vst [vmem:[%s260 + $0x110] sm:$0xff] %v1341
        %2122 = vst [vmem:[%s260 + $0x118] sm:$0xff] %v1343
        %2123 = vst [vmem:[%s260 + $0x120] sm:$0xff] %v1454
        %2124 = vst [vmem:[%s260 + $0x128] sm:$0xff] %v1456
        %2125 = vst [vmem:[%s260 + $0x130] sm:$0xff] %v1567
        %2126 = vst [vmem:[%s260 + $0x138] sm:$0xff] %v1569
        %2127 = vst [vmem:[%s260 + $0x140] sm:$0xff] %v1680
        %2128 = vst [vmem:[%s260 + $0x148] sm:$0xff] %v1682
        %2129 = vst [vmem:[%s260 + $0x150] sm:$0xff] %v1793
        %2130 = vst [vmem:[%s260 + $0x158] sm:$0xff] %v1795
        %2131 = vst [vmem:[%s260 + $0x160] sm:$0xff] %v1906
        %2132 = vst [vmem:[%s260 + $0x168] sm:$0xff] %v1908
        %2133 = vst [vmem:[%s260 + $0x170] sm:$0xff] %v2019
        %2134 = vst [vmem:[%s260 + $0x178] sm:$0xff] %v2021
        %2135 = vst [vmem:[%s260 + $0x180] sm:$0xff] %v1232
        %2136 = vst [vmem:[%s260 + $0x188] sm:$0xff] %v1234
        %2137 = vst [vmem:[%s260 + $0x190] sm:$0xff] %v1345
        %2138 = vst [vmem:[%s260 + $0x198] sm:$0xff] %v1347
        %2139 = vst [vmem:[%s260 + $0x1a0] sm:$0xff] %v1458
        %2140 = vst [vmem:[%s260 + $0x1a8] sm:$0xff] %v1460
        %2141 = vst [vmem:[%s260 + $0x1b0] sm:$0xff] %v1571
        %2142 = vst [vmem:[%s260 + $0x1b8] sm:$0xff] %v1573
        %2143 = vst [vmem:[%s260 + $0x1c0] sm:$0xff] %v1684
        %2144 = vst [vmem:[%s260 + $0x1c8] sm:$0xff] %v1686
        %2145 = vst [vmem:[%s260 + $0x1d0] sm:$0xff] %v1797
        %2146 = vst [vmem:[%s260 + $0x1d8] sm:$0xff] %v1799
        %2147 = vst [vmem:[%s260 + $0x1e0] sm:$0xff] %v1910
        %2148 = vst [vmem:[%s260 + $0x1e8] sm:$0xff] %v1912
        %2149 = vst [vmem:[%s260 + $0x1f0] sm:$0xff] %v2023
        %2150 = vst [vmem:[%s260 + $0x1f8] sm:$0xff] %v2025
        %2151 = vst [vmem:[%s260 + $0x200] sm:$0xff] %v1238
        %2152 = vst [vmem:[%s260 + $0x208] sm:$0xff] %v1240
        %2153 = vst [vmem:[%s260 + $0x210] sm:$0xff] %v1351
        %2154 = vst [vmem:[%s260 + $0x218] sm:$0xff] %v1353
        %2155 = vst [vmem:[%s260 + $0x220] sm:$0xff] %v1464
        %2156 = vst [vmem:[%s260 + $0x228] sm:$0xff] %v1466
        %2157 = vst [vmem:[%s260 + $0x230] sm:$0xff] %v1577
        %2158 = vst [vmem:[%s260 + $0x238] sm:$0xff] %v1579
        %2159 = vst [vmem:[%s260 + $0x240] sm:$0xff] %v1690
        %2160 = vst [vmem:[%s260 + $0x248] sm:$0xff] %v1692
        %2161 = vst [vmem:[%s260 + $0x250] sm:$0xff] %v1803
        %2162 = vst [vmem:[%s260 + $0x258] sm:$0xff] %v1805
        %2163 = vst [vmem:[%s260 + $0x260] sm:$0xff] %v1916
        %2164 = vst [vmem:[%s260 + $0x268] sm:$0xff] %v1918
        %2165 = vst [vmem:[%s260 + $0x270] sm:$0xff] %v2029
        %2166 = vst [vmem:[%s260 + $0x278] sm:$0xff] %v2031
        %2167 = vst [vmem:[%s260 + $0x280] sm:$0xff] %v1242
        %2168 = vst [vmem:[%s260 + $0x288] sm:$0xff] %v1244
        %2169 = vst [vmem:[%s260 + $0x290] sm:$0xff] %v1355
        %2170 = vst [vmem:[%s260 + $0x298] sm:$0xff] %v1357
        %2171 = vst [vmem:[%s260 + $0x2a0] sm:$0xff] %v1468
        %2172 = vst [vmem:[%s260 + $0x2a8] sm:$0xff] %v1470
        %2173 = vst [vmem:[%s260 + $0x2b0] sm:$0xff] %v1581
        %2174 = vst [vmem:[%s260 + $0x2b8] sm:$0xff] %v1583
        %2175 = vst [vmem:[%s260 + $0x2c0] sm:$0xff] %v1694
        %2176 = vst [vmem:[%s260 + $0x2c8] sm:$0xff] %v1696
        %2177 = vst [vmem:[%s260 + $0x2d0] sm:$0xff] %v1807
        %2178 = vst [vmem:[%s260 + $0x2d8] sm:$0xff] %v1809
        %2179 = vst [vmem:[%s260 + $0x2e0] sm:$0xff] %v1920
        %2180 = vst [vmem:[%s260 + $0x2e8] sm:$0xff] %v1922
        %2181 = vst [vmem:[%s260 + $0x2f0] sm:$0xff] %v2033
        %2182 = vst [vmem:[%s260 + $0x2f8] sm:$0xff] %v2035
        %2183 = vst [vmem:[%s260 + $0x300] sm:$0xff] %v1248
        %2184 = vst [vmem:[%s260 + $0x308] sm:$0xff] %v1250
        %2185 = vst [vmem:[%s260 + $0x310] sm:$0xff] %v1361
        %2186 = vst [vmem:[%s260 + $0x318] sm:$0xff] %v1363
        %2187 = vst [vmem:[%s260 + $0x320] sm:$0xff] %v1474
        %2188 = vst [vmem:[%s260 + $0x328] sm:$0xff] %v1476
        %2189 = vst [vmem:[%s260 + $0x330] sm:$0xff] %v1587
        %2190 = vst [vmem:[%s260 + $0x338] sm:$0xff] %v1589
        %2191 = vst [vmem:[%s260 + $0x340] sm:$0xff] %v1700
        %2192 = vst [vmem:[%s260 + $0x348] sm:$0xff] %v1702
        %2193 = vst [vmem:[%s260 + $0x350] sm:$0xff] %v1813
        %2194 = vst [vmem:[%s260 + $0x358] sm:$0xff] %v1815
        %2195 = vst [vmem:[%s260 + $0x360] sm:$0xff] %v1926
        %2196 = vst [vmem:[%s260 + $0x368] sm:$0xff] %v1928
        %2197 = vst [vmem:[%s260 + $0x370] sm:$0xff] %v2039
        %2198 = vst [vmem:[%s260 + $0x378] sm:$0xff] %v2041
        %2199 = vst [vmem:[%s260 + $0x380] sm:$0xff] %v1252
        %2200 = vst [vmem:[%s260 + $0x388] sm:$0xff] %v1254
        %2201 = vst [vmem:[%s260 + $0x390] sm:$0xff] %v1365
        %2202 = vst [vmem:[%s260 + $0x398] sm:$0xff] %v1367
        %2203 = vst [vmem:[%s260 + $0x3a0] sm:$0xff] %v1478
        %2204 = vst [vmem:[%s260 + $0x3a8] sm:$0xff] %v1480
        %2205 = vst [vmem:[%s260 + $0x3b0] sm:$0xff] %v1591
        %2206 = vst [vmem:[%s260 + $0x3b8] sm:$0xff] %v1593
        %2207 = vst [vmem:[%s260 + $0x3c0] sm:$0xff] %v1704
        %2208 = vst [vmem:[%s260 + $0x3c8] sm:$0xff] %v1706
        %2209 = vst [vmem:[%s260 + $0x3d0] sm:$0xff] %v1817
        %2210 = vst [vmem:[%s260 + $0x3d8] sm:$0xff] %v1819
        %2211 = vst [vmem:[%s260 + $0x3e0] sm:$0xff] %v1930
        %2212 = vst [vmem:[%s260 + $0x3e8] sm:$0xff] %v1932
        %2213 = vst [vmem:[%s260 + $0x3f0] sm:$0xff] %v2043
        %2214 = vst [vmem:[%s260 + $0x3f8] sm:$0xff] %v2045
        %2215 = vst [vmem:[%s260 + $0x400] sm:$0xff] %v1258
        %2216 = vst [vmem:[%s260 + $0x408] sm:$0xff] %v1260
        %2217 = vst [vmem:[%s260 + $0x410] sm:$0xff] %v1371
        %2218 = vst [vmem:[%s260 + $0x418] sm:$0xff] %v1373
        %2219 = vst [vmem:[%s260 + $0x420] sm:$0xff] %v1484
        %2220 = vst [vmem:[%s260 + $0x428] sm:$0xff] %v1486
        %2221 = vst [vmem:[%s260 + $0x430] sm:$0xff] %v1597
        %2222 = vst [vmem:[%s260 + $0x438] sm:$0xff] %v1599
        %2223 = vst [vmem:[%s260 + $0x440] sm:$0xff] %v1710
        %2224 = vst [vmem:[%s260 + $0x448] sm:$0xff] %v1712
        %2225 = vst [vmem:[%s260 + $0x450] sm:$0xff] %v1823
        %2226 = vst [vmem:[%s260 + $0x458] sm:$0xff] %v1825
        %2227 = vst [vmem:[%s260 + $0x460] sm:$0xff] %v1936
        %2228 = vst [vmem:[%s260 + $0x468] sm:$0xff] %v1938
        %2229 = vst [vmem:[%s260 + $0x470] sm:$0xff] %v2049
        %2230 = vst [vmem:[%s260 + $0x478] sm:$0xff] %v2051
        %2231 = vst [vmem:[%s260 + $0x480] sm:$0xff] %v1262
        %2232 = vst [vmem:[%s260 + $0x488] sm:$0xff] %v1264
        %2233 = vst [vmem:[%s260 + $0x490] sm:$0xff] %v1375
        %2234 = vst [vmem:[%s260 + $0x498] sm:$0xff] %v1377
        %2235 = vst [vmem:[%s260 + $0x4a0] sm:$0xff] %v1488
        %2236 = vst [vmem:[%s260 + $0x4a8] sm:$0xff] %v1490
        %2237 = vst [vmem:[%s260 + $0x4b0] sm:$0xff] %v1601
        %2238 = vst [vmem:[%s260 + $0x4b8] sm:$0xff] %v1603
        %2239 = vst [vmem:[%s260 + $0x4c0] sm:$0xff] %v1714
        %2240 = vst [vmem:[%s260 + $0x4c8] sm:$0xff] %v1716
        %2241 = vst [vmem:[%s260 + $0x4d0] sm:$0xff] %v1827
        %2242 = vst [vmem:[%s260 + $0x4d8] sm:$0xff] %v1829
        %2243 = vst [vmem:[%s260 + $0x4e0] sm:$0xff] %v1940
        %2244 = vst [vmem:[%s260 + $0x4e8] sm:$0xff] %v1942
        %2245 = vst [vmem:[%s260 + $0x4f0] sm:$0xff] %v2053
        %2246 = vst [vmem:[%s260 + $0x4f8] sm:$0xff] %v2055
        %2247 = vst [vmem:[%s260 + $0x500] sm:$0xff] %v1268
        %2248 = vst [vmem:[%s260 + $0x508] sm:$0xff] %v1270
        %2249 = vst [vmem:[%s260 + $0x510] sm:$0xff] %v1381
        %2250 = vst [vmem:[%s260 + $0x518] sm:$0xff] %v1383
        %2251 = vst [vmem:[%s260 + $0x520] sm:$0xff] %v1494
        %2252 = vst [vmem:[%s260 + $0x528] sm:$0xff] %v1496
        %2253 = vst [vmem:[%s260 + $0x530] sm:$0xff] %v1607
        %2254 = vst [vmem:[%s260 + $0x538] sm:$0xff] %v1609
        %2255 = vst [vmem:[%s260 + $0x540] sm:$0xff] %v1720
        %2256 = vst [vmem:[%s260 + $0x548] sm:$0xff] %v1722
        %2257 = vst [vmem:[%s260 + $0x550] sm:$0xff] %v1833
        %2258 = vst [vmem:[%s260 + $0x558] sm:$0xff] %v1835
        %2259 = vst [vmem:[%s260 + $0x560] sm:$0xff] %v1946
        %2260 = vst [vmem:[%s260 + $0x568] sm:$0xff] %v1948
        %2261 = vst [vmem:[%s260 + $0x570] sm:$0xff] %v2059
        %2262 = vst [vmem:[%s260 + $0x578] sm:$0xff] %v2061
        %2263 = vst [vmem:[%s260 + $0x580] sm:$0xff] %v1272
        %2264 = vst [vmem:[%s260 + $0x588] sm:$0xff] %v1274
        %2265 = vst [vmem:[%s260 + $0x590] sm:$0xff] %v1385
        %2266 = vst [vmem:[%s260 + $0x598] sm:$0xff] %v1387
        %2267 = vst [vmem:[%s260 + $0x5a0] sm:$0xff] %v1498
        %2268 = vst [vmem:[%s260 + $0x5a8] sm:$0xff] %v1500
        %2269 = vst [vmem:[%s260 + $0x5b0] sm:$0xff] %v1611
        %2270 = vst [vmem:[%s260 + $0x5b8] sm:$0xff] %v1613
        %2271 = vst [vmem:[%s260 + $0x5c0] sm:$0xff] %v1724
        %2272 = vst [vmem:[%s260 + $0x5c8] sm:$0xff] %v1726
        %2273 = vst [vmem:[%s260 + $0x5d0] sm:$0xff] %v1837
        %2274 = vst [vmem:[%s260 + $0x5d8] sm:$0xff] %v1839
        %2275 = vst [vmem:[%s260 + $0x5e0] sm:$0xff] %v1950
        %2276 = vst [vmem:[%s260 + $0x5e8] sm:$0xff] %v1952
        %2277 = vst [vmem:[%s260 + $0x5f0] sm:$0xff] %v2063
        %2278 = vst [vmem:[%s260 + $0x5f8] sm:$0xff] %v2065
        %2279 = vst [vmem:[%s260 + $0x600] sm:$0xff] %v1278
        %2280 = vst [vmem:[%s260 + $0x608] sm:$0xff] %v1280
        %2281 = vst [vmem:[%s260 + $0x610] sm:$0xff] %v1391
        %2282 = vst [vmem:[%s260 + $0x618] sm:$0xff] %v1393
        %2283 = vst [vmem:[%s260 + $0x620] sm:$0xff] %v1504
        %2284 = vst [vmem:[%s260 + $0x628] sm:$0xff] %v1506
        %2285 = vst [vmem:[%s260 + $0x630] sm:$0xff] %v1617
        %2286 = vst [vmem:[%s260 + $0x638] sm:$0xff] %v1619
        %2287 = vst [vmem:[%s260 + $0x640] sm:$0xff] %v1730
        %2288 = vst [vmem:[%s260 + $0x648] sm:$0xff] %v1732
        %2289 = vst [vmem:[%s260 + $0x650] sm:$0xff] %v1843
        %2290 = vst [vmem:[%s260 + $0x658] sm:$0xff] %v1845
        %2291 = vst [vmem:[%s260 + $0x660] sm:$0xff] %v1956
        %2292 = vst [vmem:[%s260 + $0x668] sm:$0xff] %v1958
        %2293 = vst [vmem:[%s260 + $0x670] sm:$0xff] %v2069
        %2294 = vst [vmem:[%s260 + $0x678] sm:$0xff] %v2071
        %2295 = vst [vmem:[%s260 + $0x680] sm:$0xff] %v1282
        %2296 = vst [vmem:[%s260 + $0x688] sm:$0xff] %v1284
        %2297 = vst [vmem:[%s260 + $0x690] sm:$0xff] %v1395
        %2298 = vst [vmem:[%s260 + $0x698] sm:$0xff] %v1397
        %2299 = vst [vmem:[%s260 + $0x6a0] sm:$0xff] %v1508
        %2300 = vst [vmem:[%s260 + $0x6a8] sm:$0xff] %v1510
        %2301 = vst [vmem:[%s260 + $0x6b0] sm:$0xff] %v1621
        %2302 = vst [vmem:[%s260 + $0x6b8] sm:$0xff] %v1623
        %2303 = vst [vmem:[%s260 + $0x6c0] sm:$0xff] %v1734
        %2304 = vst [vmem:[%s260 + $0x6c8] sm:$0xff] %v1736
        %2305 = vst [vmem:[%s260 + $0x6d0] sm:$0xff] %v1847
        %2306 = vst [vmem:[%s260 + $0x6d8] sm:$0xff] %v1849
        %2307 = vst [vmem:[%s260 + $0x6e0] sm:$0xff] %v1960
        %2308 = vst [vmem:[%s260 + $0x6e8] sm:$0xff] %v1962
        %2309 = vst [vmem:[%s260 + $0x6f0] sm:$0xff] %v2073
        %2310 = vst [vmem:[%s260 + $0x6f8] sm:$0xff] %v2075
        %2311 = vst [vmem:[%s260 + $0x700] sm:$0xff] %v1288
        %2312 = vst [vmem:[%s260 + $0x708] sm:$0xff] %v1290
        %2313 = vst [vmem:[%s260 + $0x710] sm:$0xff] %v1401
        %2314 = vst [vmem:[%s260 + $0x718] sm:$0xff] %v1403
        %2315 = vst [vmem:[%s260 + $0x720] sm:$0xff] %v1514
        %2316 = vst [vmem:[%s260 + $0x728] sm:$0xff] %v1516
        %2317 = vst [vmem:[%s260 + $0x730] sm:$0xff] %v1627
        %2318 = vst [vmem:[%s260 + $0x738] sm:$0xff] %v1629
        %2319 = vst [vmem:[%s260 + $0x740] sm:$0xff] %v1740
        %2320 = vst [vmem:[%s260 + $0x748] sm:$0xff] %v1742
        %2321 = vst [vmem:[%s260 + $0x750] sm:$0xff] %v1853
        %2322 = vst [vmem:[%s260 + $0x758] sm:$0xff] %v1855
        %2323 = vst [vmem:[%s260 + $0x760] sm:$0xff] %v1966
        %2324 = vst [vmem:[%s260 + $0x768] sm:$0xff] %v1968
        %2325 = vst [vmem:[%s260 + $0x770] sm:$0xff] %v2079
        %2326 = vst [vmem:[%s260 + $0x778] sm:$0xff] %v2081
        %2327 = vst [vmem:[%s260 + $0x780] sm:$0xff] %v1292
        %2328 = vst [vmem:[%s260 + $0x788] sm:$0xff] %v1294
        %2329 = vst [vmem:[%s260 + $0x790] sm:$0xff] %v1405
        %2330 = vst [vmem:[%s260 + $0x798] sm:$0xff] %v1407
        %2331 = vst [vmem:[%s260 + $0x7a0] sm:$0xff] %v1518
        %2332 = vst [vmem:[%s260 + $0x7a8] sm:$0xff] %v1520
        %2333 = vst [vmem:[%s260 + $0x7b0] sm:$0xff] %v1631
        %2334 = vst [vmem:[%s260 + $0x7b8] sm:$0xff] %v1633
        %2335 = vst [vmem:[%s260 + $0x7c0] sm:$0xff] %v1744
        %2336 = vst [vmem:[%s260 + $0x7c8] sm:$0xff] %v1746
        %2337 = vst [vmem:[%s260 + $0x7d0] sm:$0xff] %v1857
        %2338 = vst [vmem:[%s260 + $0x7d8] sm:$0xff] %v1859
        %2339 = vst [vmem:[%s260 + $0x7e0] sm:$0xff] %v1970
        %2340 = vst [vmem:[%s260 + $0x7e8] sm:$0xff] %v1972
        %2341 = vst [vmem:[%s260 + $0x7f0] sm:$0xff] %v2083
        %2342 = vst [vmem:[%s260 + $0x7f8] sm:$0xff] %v2085
        %s2343 = sand.u32 %s121, 1
        %s2344 = scalar_lea.sflag [#allocation4], %s2343
        %s2345 = sand.u32 %s121, 1
        %s2346 = smul.addr %s2345, 2048
        %s2347 = scalar_lea.vmem [#allocation8], %s2346
        // Predicated region
        $region45: #{tpu_custom_call.1} parent=31 // pred_check
          %p2348 = pneg %p131
        $region46: #{tpu_custom_call.1} parent=31 // pred_check_branch
          %2350 = sbr.rel (%p2348) target = $region48
        $region47: #{tpu_custom_call.1} parent=31 // pred_region
          %s2351 = smul.u32 16, %s25
          %s2352 = smul.u32 16, %s26
          %s2354 = ssub.s32 32768, 32768
          %2355 = vsyncadd %s2344, %s2354
          %s2356 = smul.addr %s2351, 64
          %s2357 = sadd.s32 %s2352, %s2356
          %s2358 = smul.addr %s2357, 128
          %s2359 = scalar_lea.hbm %s3, %s2358
          %s2360 = sshll.u32 %s2347, 4
          %s2361 = int_to_ptr.vmem [resolvable:$true] %s2360
          %2366 = dma.vmem_to_hbm [thread:$0]  %s2361, 32768, %s2359, %s2344, 2048, 8192, 128
        $region48: #{tpu_custom_call.1} parent=31 // pred_fallthru
          _
      $region32: #{tpu_custom_call.1} parent=5 // pred_fallthru
        _
      %p2367 = scmp.le.s32.totalorder 2, %s16
      // Predicated region
      $region49: #{tpu_custom_call.1} parent=5 // pred_check
        %p2368 = pneg %p2367
      $region50: #{tpu_custom_call.1} parent=5 // pred_check_branch
        %2370 = sbr.rel (%p2368) target = $region52
      $region51: #{tpu_custom_call.1} parent=5 // pred_region
        %s2371 = ssub.s32 %s16, 2
        // Predicated region
        $region53: #{tpu_custom_call.1} parent=51 // pred_check
          %p2372 = pneg %p137
        $region54: #{tpu_custom_call.1} parent=51 // pred_check_branch
          %2374 = sbr.rel (%p2372) target = $region56
        $region55: #{tpu_custom_call.1} parent=51 // pred_region
          %s2375 = sand.u32 %s122, 1
          %s2376 = scalar_lea.sflag [#allocation4], %s2375
          %s2377 = sand.u32 %s122, 1
          %s2378 = smul.addr %s2377, 2048
          %s2379 = scalar_lea.vmem [#allocation8], %s2378
          %2380 = dma.done %s2376, 32768
        $region56: #{tpu_custom_call.1} parent=51 // pred_fallthru
          _
      $region52: #{tpu_custom_call.1} parent=5 // pred_fallthru
        _
    $region6: #{tpu_custom_call.1} parent=1 // loop_footer
      %s20 = sadd.s32 1, %s16
    $region7: #{tpu_custom_call.1} parent=1 // loop_footer_branch
      %15 = sbr.rel target = $region3
    $region8: #{tpu_custom_call.1} parent=1 // loop_exit
      _
    %2381 = vsyncpa [#allocation3], 1
    %s2382 = scalar_lea.sflag [#allocation3], 1
    %2383 = vsyncpa %s2382, 1
    %2384 = vsyncpa [#allocation6], 1
    %s2385 = scalar_lea.sflag [#allocation6], 1
    %2386 = vsyncpa %s2385, 1
    %2387 = vsyncpa [#allocation4], 1
    %s2388 = scalar_lea.sflag [#allocation4], 1
    %2389 = vsyncpa %s2388, 1

</llo_original>
